<compile_context>
chip_gen: v5e
topology: v5e:2x2
jax: 0.10.0
libtpu: 0.0.40
codegen_flags: <defaults>
</compile_context>

<pallas_src>
import math
from functools import partial

import jax
import jax.numpy as jnp
from jax.experimental import pallas as pl
from jax.experimental.pallas import tpu as pltpu

# ---- small, module-consistent problem sizes -------------------------------
S = 8            # sequence length
B = 2            # batch
E = 32           # d_model
H = 4            # nhead
DH = E // H      # head dim
F = 64           # dim_feedforward
NUM_LAYERS = 3   # number of (weight-shared) layer applications
EPS = 1e-5       # LayerNorm eps (PyTorch default)

_VEC_ROWS = 9    # packed small-vector slab rows
_VEC_LANES = 128


# ---------------------------------------------------------------------------
# Pallas kernel: the FULL WeightSharingEncoder forward for one batch element
# (all num_layers applications + optional final LayerNorm), weights resident.
# ---------------------------------------------------------------------------
def _encoder_kernel(x_ref, mask_ref, w_in_ref, b_in_ref, w_out_ref,
                    w1_ref, w2_ref, vec_ref, o_ref, *, num_layers, apply_norm):
    x = x_ref[0]                  # (S, E)  this batch element
    mask = mask_ref[...]          # (S, S)  additive attention mask
    w_in = w_in_ref[...]          # (H, E, 3*DH); per-head [Q|K|V], Q cols pre-scaled
    b_in = b_in_ref[...]          # (H, 1, 3*DH)
    w_out = w_out_ref[...]        # (H, DH, E)
    w1 = w1_ref[...]              # (E, F)
    w2 = w2_ref[...]              # (F, E)
    vec = vec_ref[...]            # (9, 128) packed biases / LN params

    # unpack the slab once (hoisted out of the layer loop)
    bo, b1, b2 = vec[0:1, :E], vec[1:2, :F], vec[2:3, :E]
    g1, be1 = vec[3:4, :E], vec[4:5, :E]
    g2, be2 = vec[5:6, :E], vec[6:7, :E]
    gn, ben = vec[7:8, :E], vec[8:9, :E]

    def layer_norm(z, g, b):
        mu = jnp.mean(z, axis=-1, keepdims=True)
        var = jnp.mean((z - mu) ** 2, axis=-1, keepdims=True)
        return (z - mu) * jax.lax.rsqrt(var + EPS) * g + b

    def one_layer(xin):
        # ---- multi-head self-attention, all heads batched ----
        # fused per-head Q|K|V projection: 4 batched matmuls (S,E)@(E,3*DH)
        xb = jnp.broadcast_to(xin[None], (H, S, E))
        qkv = jnp.einsum('hse,hed->hsd', xb, w_in,
                         preferred_element_type=jnp.float32) + b_in      # (H, S, 3*DH)
        q = qkv[:, :, 0:DH]                                              # (H, S, DH)
        k = qkv[:, :, DH:2 * DH]
        v = qkv[:, :, 2 * DH:3 * DH]

        # scores (1/sqrt(DH) already folded into q weights); stable softmax for all heads
        s = jnp.einsum('hqd,hkd->hqk', q, k,
                       preferred_element_type=jnp.float32) + mask[None]  # (H, S, S)
        s = s - jnp.max(s, axis=-1, keepdims=True)
        p = jnp.exp(s)
        p = p * (1.0 / jnp.sum(p, axis=-1, keepdims=True))

        ctx = jnp.einsum('hqk,hkd->hqd', p, v,
                         preferred_element_type=jnp.float32)             # (H, S, DH)
        # output projection: sum over heads == concat(heads) @ Wo
        attn = jnp.sum(jnp.einsum('hsd,hde->hse', ctx, w_out,
                                  preferred_element_type=jnp.float32),
                       axis=0) + bo                                      # (S, E)

        # ---- residual + LayerNorm1 (dropout == identity) ----
        y = layer_norm(xin + attn, g1, be1)

        # ---- feed-forward (ReLU) + residual + LayerNorm2 ----
        hid = jnp.maximum(jnp.dot(y, w1, preferred_element_type=jnp.float32) + b1, 0.0)
        ff = jnp.dot(hid, w2, preferred_element_type=jnp.float32) + b2
        return layer_norm(y + ff, g2, be2)

    for _ in range(num_layers):      # static unroll: SAME weights every iteration
        x = one_layer(x)

    if apply_norm:
        x = layer_norm(x, gn, ben)

    o_ref[0] = x.astype(o_ref.dtype)


# ---------------------------------------------------------------------------
# Wrapper
# ---------------------------------------------------------------------------
def _full(shape):
    # Whole-array block, identical for every grid step (loaded to VMEM once).
    return pl.BlockSpec(shape, lambda b: (0,) * len(shape))


def encoder_pallas(x_bse, mask, w_in, b_in, w_out, w1, w2, vec, *, num_layers, apply_norm):
    """Full shared-weight encoder forward. x_bse: (B, S, E)."""
    b_, s_, e_ = x_bse.shape
    kern = partial(_encoder_kernel, num_layers=num_layers, apply_norm=apply_norm)
    return pl.pallas_call(
        kern,
        out_shape=jax.ShapeDtypeStruct((b_, s_, e_), jnp.float32),
        grid_spec=pltpu.PrefetchScalarGridSpec(
            num_scalar_prefetch=0,
            grid=(b_,),                                  # "parallel" -> 2 TCs on v7x
            in_specs=[
                pl.BlockSpec((1, s_, e_), lambda b: (b, 0, 0)),   # x (per-batch tile)
                _full(mask.shape),                                # (S, S) additive mask
                _full(w_in.shape),                                # (H, E, 3*DH)
                _full(b_in.shape),                                # (H, 1, 3*DH)
                _full(w_out.shape),                               # (H, DH, E)
                _full(w1.shape),                                  # (E, F)
                _full(w2.shape),                                  # (F, E)
                _full(vec.shape),                                 # packed slab
            ],
            out_specs=pl.BlockSpec((1, s_, e_), lambda b: (b, 0, 0)),
        ),
        compiler_params=pltpu.CompilerParams(dimension_semantics=("parallel",)),
    )(x_bse, mask, w_in, b_in, w_out, w1, w2, vec)


@partial(jax.jit, static_argnames=("num_layers", "apply_norm"))
def weight_sharing_encoder_forward(src_sbe, mask, w_in, b_in, w_out, w1, w2, vec,
                                   num_layers=NUM_LAYERS, apply_norm=True):
    """Matches WeightSharingEncoder.forward. src_sbe: (S, B, E) PyTorch layout."""
    x = jnp.transpose(src_sbe, (1, 0, 2))          # -> (B, S, E) (tiny; negligible plumbing)
    y = encoder_pallas(x, mask, w_in, b_in, w_out, w1, w2, vec,
                       num_layers=num_layers, apply_norm=apply_norm)
    return jnp.transpose(y, (1, 0, 2))             # back to (S, B, E)


# ---------------------------------------------------------------------------
# Host-side parameter packing (per-head fused QKV layout + small-vector slab)
# ---------------------------------------------------------------------------
def pack_params(layer, norm):
    scale = 1.0 / math.sqrt(DH)

    def w_to_heads(w):                     # (E, E) -> (H, E, DH)
        return jnp.transpose(w.reshape(E, H, DH), (1, 0, 2))

    def b_to_heads(b):                     # (1, E) -> (H, DH)
        return b.reshape(H, DH)

    # fused per-head [Q|K|V] columns; softmax scale folded into the Q part
    w_in = jnp.concatenate([w_to_heads(layer["wq"] * scale),
                            w_to_heads(layer["wk"]),
                            w_to_heads(layer["wv"])], axis=-1)       # (H, E, 3*DH)
    b_in = jnp.concatenate([b_to_heads(layer["bq"] * scale),
                            b_to_heads(layer["bk"]),
                            b_to_heads(layer["bv"])], axis=-1)[:, None, :]   # (H, 1, 3*DH)
    w_out = layer["wo"].reshape(H, DH, E)                            # (H, DH, E)

    vec = jnp.zeros((_VEC_ROWS, _VEC_LANES), jnp.float32)
    vec = vec.at[0, :E].set(layer["bo"][0])
    vec = vec.at[1, :F].set(layer["b1"][0])
    vec = vec.at[2, :E].set(layer["b2"][0])
    vec = vec.at[3, :E].set(layer["g1"][0])
    vec = vec.at[4, :E].set(layer["beta1"][0])
    vec = vec.at[5, :E].set(layer["g2"][0])
    vec = vec.at[6, :E].set(layer["beta2"][0])
    if norm is not None:
        vec = vec.at[7, :E].set(norm["gamma"][0])
        vec = vec.at[8, :E].set(norm["beta"][0])
    return w_in, b_in, w_out, layer["w1"], layer["w2"], vec, norm is not None


# ---------------------------------------------------------------------------
# Pure-JAX reference (independent math, natural params) for a runtime check
# ---------------------------------------------------------------------------
def _ref_layer(x, mask, p):
    q = x @ p["wq"] + p["bq"]
    k = x @ p["wk"] + p["bk"]
    v = x @ p["wv"] + p["bv"]
    outs = []
    for h in range(H):
        sl = slice(h * DH, (h + 1) * DH)
        s = (q[..., sl] @ jnp.swapaxes(k[..., sl], -1, -2)) / math.sqrt(DH) + mask
        p_attn = jax.nn.softmax(s, axis=-1)
        outs.append(p_attn @ v[..., sl])
    a = jnp.concatenate(outs, axis=-1) @ p["wo"] + p["bo"]
    y = x + a
    mu = y.mean(-1, keepdims=True); var = ((y - mu) ** 2).mean(-1, keepdims=True)
    y = (y - mu) / jnp.sqrt(var + EPS) * p["g1"] + p["beta1"]
    f = jnp.maximum(y @ p["w1"] + p["b1"], 0.0) @ p["w2"] + p["b2"]
    z = y + f
    mu = z.mean(-1, keepdims=True); var = ((z - mu) ** 2).mean(-1, keepdims=True)
    return (z - mu) / jnp.sqrt(var + EPS) * p["g2"] + p["beta2"]


def _ref_forward(src_sbe, mask, lp, np_):
    x = jnp.transpose(src_sbe, (1, 0, 2))
    for _ in range(NUM_LAYERS):
        x = _ref_layer(x, mask, lp)
    if np_ is not None:
        mu = x.mean(-1, keepdims=True); var = ((x - mu) ** 2).mean(-1, keepdims=True)
        x = (x - mu) / jnp.sqrt(var + EPS) * np_["gamma"] + np_["beta"]
    return jnp.transpose(x, (1, 0, 2))


# ---------------------------------------------------------------------------
# Deterministic parameter construction + demo
# ---------------------------------------------------------------------------
def _make_params(key):
    ks = jax.random.split(key, 10)
    sc_e = 1.0 / math.sqrt(E)
    sc_f = 1.0 / math.sqrt(F)
    layer = {
        # attention in-proj (stored pre-transposed for x @ W), shared across layers
        "wq": jax.random.normal(ks[0], (E, E), jnp.float32) * sc_e,
        "wk": jax.random.normal(ks[1], (E, E), jnp.float32) * sc_e,
        "wv": jax.random.normal(ks[2], (E, E), jnp.float32) * sc_e,
        "bq": jnp.zeros((1, E), jnp.float32),
        "bk": jnp.zeros((1, E), jnp.float32),
        "bv": jnp.zeros((1, E), jnp.float32),
        "wo": jax.random.normal(ks[3], (E, E), jnp.float32) * sc_e,
        "bo": jax.random.normal(ks[4], (1, E), jnp.float32) * 0.01,
        # feed-forward
        "w1": jax.random.normal(ks[5], (E, F), jnp.float32) * sc_e,
        "b1": jax.random.normal(ks[6], (1, F), jnp.float32) * 0.01,
        "w2": jax.random.normal(ks[7], (F, E), jnp.float32) * sc_f,
        "b2": jax.random.normal(ks[8], (1, E), jnp.float32) * 0.01,
        # layer norms
        "g1": jnp.ones((1, E), jnp.float32),
        "beta1": jnp.zeros((1, E), jnp.float32),
        "g2": jnp.ones((1, E), jnp.float32),
        "beta2": jnp.zeros((1, E), jnp.float32),
    }
    norm = {"gamma": jnp.ones((1, E), jnp.float32),
            "beta": jnp.zeros((1, E), jnp.float32)}
    return layer, norm


if __name__ == "__main__":
    key = jax.random.PRNGKey(0)
    k_src, k_params = jax.random.split(key)

    # src in PyTorch's (S, B, E) layout; additive causal-style attention mask.
    src = jax.random.normal(k_src, (S, B, E), jnp.float32)
    mask = jnp.where(jnp.triu(jnp.ones((S, S), jnp.bool_), k=1), -1e9, 0.0).astype(jnp.float32)

    layer_params, norm_params = _make_params(k_params)
    w_in, b_in, w_out, w1, w2, vec, has_norm = pack_params(layer_params, norm_params)

    out = weight_sharing_encoder_forward(src, mask, w_in, b_in, w_out, w1, w2, vec,
                                         num_layers=NUM_LAYERS, apply_norm=has_norm)
    out = jax.block_until_ready(out)

    ref = _ref_forward(src, mask, layer_params, norm_params)
    assert out.shape == (S, B, E)
    assert jnp.allclose(out, ref, atol=1e-4, rtol=1e-4), "Pallas output mismatch vs JAX reference"

    print("KERNEL_OK")
</pallas_src>

<mosaic_0001>
module attributes {stable_mosaic.version = 11 : i64} {
  func.func @_encoder_kernel(%arg0: i32, %arg1: memref<1x8x32xf32, #tpu.memory_space<vmem>>, %arg2: memref<8x8xf32, #tpu.memory_space<vmem>>, %arg3: memref<4x32x24xf32, #tpu.memory_space<vmem>>, %arg4: memref<4x1x24xf32, #tpu.memory_space<vmem>>, %arg5: memref<4x8x32xf32, #tpu.memory_space<vmem>>, %arg6: memref<32x64xf32, #tpu.memory_space<vmem>>, %arg7: memref<64x32xf32, #tpu.memory_space<vmem>>, %arg8: memref<9x128xf32, #tpu.memory_space<vmem>>, %arg9: memref<1x8x32xf32, #tpu.memory_space<vmem>>) attributes {dimension_semantics = [#tpu.dimension_semantics<parallel>], iteration_bounds = array<i64: 2>, scalar_prefetch = 0 : i64, scratch_operands = 0 : i64, tpu.core_type = #tpu.core_type<tc>, window_params = [{transform_indices = @transform_0, window_bounds = array<i64: 1, 8, 32>}, {pipeline_mode = #tpu.pipeline_mode<synchronous>, transform_indices = @transform_1, window_bounds = array<i64: 8, 8>}, {pipeline_mode = #tpu.pipeline_mode<synchronous>, transform_indices = @transform_2, window_bounds = array<i64: 4, 32, 24>}, {pipeline_mode = #tpu.pipeline_mode<synchronous>, transform_indices = @transform_3, window_bounds = array<i64: 4, 1, 24>}, {pipeline_mode = #tpu.pipeline_mode<synchronous>, transform_indices = @transform_4, window_bounds = array<i64: 4, 8, 32>}, {pipeline_mode = #tpu.pipeline_mode<synchronous>, transform_indices = @transform_5, window_bounds = array<i64: 32, 64>}, {pipeline_mode = #tpu.pipeline_mode<synchronous>, transform_indices = @transform_6, window_bounds = array<i64: 64, 32>}, {pipeline_mode = #tpu.pipeline_mode<synchronous>, transform_indices = @transform_7, window_bounds = array<i64: 9, 128>}, {transform_indices = @transform_8, window_bounds = array<i64: 1, 8, 32>}]} {
    %c0 = arith.constant 0 : index
    %c0_0 = arith.constant 0 : index
    %c0_1 = arith.constant 0 : index
    %0 = vector.load %arg1[%c0, %c0_0, %c0_1] : memref<1x8x32xf32, #tpu.memory_space<vmem>>, vector<1x8x32xf32>
    %1 = vector.shape_cast %0 : vector<1x8x32xf32> to vector<8x32xf32>
    %c0_2 = arith.constant 0 : index
    %c0_3 = arith.constant 0 : index
    %2 = vector.load %arg2[%c0_2, %c0_3] : memref<8x8xf32, #tpu.memory_space<vmem>>, vector<8x8xf32>
    %c0_4 = arith.constant 0 : index
    %c0_5 = arith.constant 0 : index
    %c0_6 = arith.constant 0 : index
    %3 = vector.load %arg3[%c0_4, %c0_5, %c0_6] : memref<4x32x24xf32, #tpu.memory_space<vmem>>, vector<4x32x24xf32>
    %c0_7 = arith.constant 0 : index
    %c0_8 = arith.constant 0 : index
    %c0_9 = arith.constant 0 : index
    %4 = vector.load %arg4[%c0_7, %c0_8, %c0_9] : memref<4x1x24xf32, #tpu.memory_space<vmem>>, vector<4x1x24xf32>
    %c0_10 = arith.constant 0 : index
    %c0_11 = arith.constant 0 : index
    %c0_12 = arith.constant 0 : index
    %5 = vector.load %arg5[%c0_10, %c0_11, %c0_12] : memref<4x8x32xf32, #tpu.memory_space<vmem>>, vector<4x8x32xf32>
    %c0_13 = arith.constant 0 : index
    %c0_14 = arith.constant 0 : index
    %6 = vector.load %arg6[%c0_13, %c0_14] : memref<32x64xf32, #tpu.memory_space<vmem>>, vector<32x64xf32>
    %c0_15 = arith.constant 0 : index
    %c0_16 = arith.constant 0 : index
    %7 = vector.load %arg7[%c0_15, %c0_16] : memref<64x32xf32, #tpu.memory_space<vmem>>, vector<64x32xf32>
    %c0_17 = arith.constant 0 : index
    %c0_18 = arith.constant 0 : index
    %8 = vector.load %arg8[%c0_17, %c0_18] : memref<9x128xf32, #tpu.memory_space<vmem>>, vector<9x128xf32>
    %9 = vector.extract_strided_slice %8 {offsets = [0, 0], sizes = [1, 32], strides = [1, 1]} : vector<9x128xf32> to vector<1x32xf32>
    %10 = vector.extract_strided_slice %8 {offsets = [1, 0], sizes = [1, 64], strides = [1, 1]} : vector<9x128xf32> to vector<1x64xf32>
    %11 = vector.extract_strided_slice %8 {offsets = [2, 0], sizes = [1, 32], strides = [1, 1]} : vector<9x128xf32> to vector<1x32xf32>
    %12 = vector.extract_strided_slice %8 {offsets = [3, 0], sizes = [1, 32], strides = [1, 1]} : vector<9x128xf32> to vector<1x32xf32>
    %13 = vector.extract_strided_slice %8 {offsets = [4, 0], sizes = [1, 32], strides = [1, 1]} : vector<9x128xf32> to vector<1x32xf32>
    %14 = vector.extract_strided_slice %8 {offsets = [5, 0], sizes = [1, 32], strides = [1, 1]} : vector<9x128xf32> to vector<1x32xf32>
    %15 = vector.extract_strided_slice %8 {offsets = [6, 0], sizes = [1, 32], strides = [1, 1]} : vector<9x128xf32> to vector<1x32xf32>
    %16 = vector.extract_strided_slice %8 {offsets = [7, 0], sizes = [1, 32], strides = [1, 1]} : vector<9x128xf32> to vector<1x32xf32>
    %17 = vector.extract_strided_slice %8 {offsets = [8, 0], sizes = [1, 32], strides = [1, 1]} : vector<9x128xf32> to vector<1x32xf32>
    %18 = vector.shape_cast %1 : vector<8x32xf32> to vector<1x8x32xf32>
    %19 = vector.shape_cast %18 : vector<1x8x32xf32> to vector<1x8x32xf32>
    %20 = vector.broadcast %19 : vector<1x8x32xf32> to vector<4x8x32xf32>
    "tpu.trace_start"() <{level = 10 : i32, message = "hse,hed->hsd"}> : () -> ()
    %cst = arith.constant dense<0.000000e+00> : vector<4x8x24xf32>
    %21 = tpu.matmul %20, %3, %cst {dimension_numbers = #tpu.dot_dimension_numbers<[2], [1], [1], [2], [0, 0, 0, 1, 1, 2], [0], [0]>} : vector<4x8x32xf32>, vector<4x32x24xf32>, vector<4x8x24xf32> -> vector<4x8x24xf32>
    "tpu.trace_stop"() : () -> ()
    %22 = vector.broadcast %4 : vector<4x1x24xf32> to vector<4x8x24xf32>
    %23 = arith.addf %21, %22 : vector<4x8x24xf32>
    %24 = vector.extract_strided_slice %23 {offsets = [0, 0, 0], sizes = [4, 8, 8], strides = [1, 1, 1]} : vector<4x8x24xf32> to vector<4x8x8xf32>
    %25 = vector.extract_strided_slice %23 {offsets = [0, 0, 8], sizes = [4, 8, 8], strides = [1, 1, 1]} : vector<4x8x24xf32> to vector<4x8x8xf32>
    %26 = vector.extract_strided_slice %23 {offsets = [0, 0, 16], sizes = [4, 8, 8], strides = [1, 1, 1]} : vector<4x8x24xf32> to vector<4x8x8xf32>
    "tpu.trace_start"() <{level = 10 : i32, message = "hqd,hkd->hqk"}> : () -> ()
    %cst_19 = arith.constant dense<0.000000e+00> : vector<4x8x8xf32>
    %27 = tpu.matmul %24, %25, %cst_19 {dimension_numbers = #tpu.dot_dimension_numbers<[2], [2], [1], [1], [0, 0, 0, 1, 1, 1], [0], [0]>} : vector<4x8x8xf32>, vector<4x8x8xf32>, vector<4x8x8xf32> -> vector<4x8x8xf32>
    "tpu.trace_stop"() : () -> ()
    %28 = vector.shape_cast %2 : vector<8x8xf32> to vector<1x8x8xf32>
    %29 = vector.broadcast %28 : vector<1x8x8xf32> to vector<4x8x8xf32>
    %30 = arith.addf %27, %29 : vector<4x8x8xf32>
    %cst_20 = arith.constant dense<0xFF800000> : vector<4x8xf32>
    %31 = vector.multi_reduction <maximumf>, %30, %cst_20 [2] : vector<4x8x8xf32> to vector<4x8xf32>
    %32 = vector.shape_cast %31 : vector<4x8xf32> to vector<4x8x1xf32>
    %33 = vector.broadcast %32 : vector<4x8x1xf32> to vector<4x8x8xf32>
    %34 = arith.subf %30, %33 : vector<4x8x8xf32>
    %35 = math.exp %34 : vector<4x8x8xf32>
    %cst_21 = arith.constant dense<0.000000e+00> : vector<4x8xf32>
    %36 = vector.multi_reduction <add>, %35, %cst_21 [2] : vector<4x8x8xf32> to vector<4x8xf32>
    %37 = vector.shape_cast %36 : vector<4x8xf32> to vector<4x8x1xf32>
    %cst_22 = arith.constant 1.000000e+00 : f32
    %38 = vector.broadcast %cst_22 : f32 to vector<4x8x1xf32>
    %39 = arith.divf %38, %37 : vector<4x8x1xf32>
    %40 = vector.broadcast %39 : vector<4x8x1xf32> to vector<4x8x8xf32>
    %41 = arith.mulf %35, %40 : vector<4x8x8xf32>
    "tpu.trace_start"() <{level = 10 : i32, message = "hqk,hkd->hqd"}> : () -> ()
    %cst_23 = arith.constant dense<0.000000e+00> : vector<4x8x8xf32>
    %42 = tpu.matmul %41, %26, %cst_23 {dimension_numbers = #tpu.dot_dimension_numbers<[2], [1], [1], [2], [0, 0, 0, 1, 1, 2], [0], [0]>} : vector<4x8x8xf32>, vector<4x8x8xf32>, vector<4x8x8xf32> -> vector<4x8x8xf32>
    "tpu.trace_stop"() : () -> ()
    "tpu.trace_start"() <{level = 10 : i32, message = "hsd,hde->hse"}> : () -> ()
    %cst_24 = arith.constant dense<0.000000e+00> : vector<4x8x32xf32>
    %43 = tpu.matmul %42, %5, %cst_24 {dimension_numbers = #tpu.dot_dimension_numbers<[2], [1], [1], [2], [0, 0, 0, 1, 1, 2], [0], [0]>} : vector<4x8x8xf32>, vector<4x8x32xf32>, vector<4x8x32xf32> -> vector<4x8x32xf32>
    "tpu.trace_stop"() : () -> ()
    %cst_25 = arith.constant dense<0.000000e+00> : vector<8x32xf32>
    %44 = vector.multi_reduction <add>, %43, %cst_25 [0] : vector<4x8x32xf32> to vector<8x32xf32>
    %45 = vector.broadcast %9 : vector<1x32xf32> to vector<8x32xf32>
    %46 = arith.addf %44, %45 : vector<8x32xf32>
    %47 = arith.addf %1, %46 : vector<8x32xf32>
    %cst_26 = arith.constant dense<0.000000e+00> : vector<8xf32>
    %48 = vector.multi_reduction <add>, %47, %cst_26 [1] : vector<8x32xf32> to vector<8xf32>
    %49 = vector.shape_cast %48 : vector<8xf32> to vector<8x1xf32>
    %cst_27 = arith.constant 3.200000e+01 : f32
    %50 = vector.broadcast %cst_27 : f32 to vector<8x1xf32>
    %51 = arith.divf %49, %50 : vector<8x1xf32>
    %52 = vector.broadcast %51 : vector<8x1xf32> to vector<8x32xf32>
    %53 = arith.subf %47, %52 : vector<8x32xf32>
    %54 = arith.mulf %53, %53 : vector<8x32xf32>
    %cst_28 = arith.constant dense<0.000000e+00> : vector<8xf32>
    %55 = vector.multi_reduction <add>, %54, %cst_28 [1] : vector<8x32xf32> to vector<8xf32>
    %56 = vector.shape_cast %55 : vector<8xf32> to vector<8x1xf32>
    %cst_29 = arith.constant 3.200000e+01 : f32
    %57 = vector.broadcast %cst_29 : f32 to vector<8x1xf32>
    %58 = arith.divf %56, %57 : vector<8x1xf32>
    %59 = vector.broadcast %51 : vector<8x1xf32> to vector<8x32xf32>
    %60 = arith.subf %47, %59 : vector<8x32xf32>
    %cst_30 = arith.constant 9.99999974E-6 : f32
    %61 = vector.broadcast %cst_30 : f32 to vector<8x1xf32>
    %62 = arith.addf %58, %61 : vector<8x1xf32>
    %63 = math.rsqrt %62 : vector<8x1xf32>
    %64 = vector.broadcast %63 : vector<8x1xf32> to vector<8x32xf32>
    %65 = arith.mulf %60, %64 : vector<8x32xf32>
    %66 = vector.broadcast %12 : vector<1x32xf32> to vector<8x32xf32>
    %67 = arith.mulf %65, %66 : vector<8x32xf32>
    %68 = vector.broadcast %13 : vector<1x32xf32> to vector<8x32xf32>
    %69 = arith.addf %67, %68 : vector<8x32xf32>
    %cst_31 = arith.constant dense<0.000000e+00> : vector<8x64xf32>
    %70 = tpu.matmul %69, %6, %cst_31 {dimension_numbers = #tpu.dot_dimension_numbers<[1], [0], [0], [1], [0, 0, 1, 1], [], []>} : vector<8x32xf32>, vector<32x64xf32>, vector<8x64xf32> -> vector<8x64xf32>
    %71 = vector.broadcast %10 : vector<1x64xf32> to vector<8x64xf32>
    %72 = arith.addf %70, %71 : vector<8x64xf32>
    %cst_32 = arith.constant 0.000000e+00 : f32
    %73 = vector.broadcast %cst_32 : f32 to vector<8x64xf32>
    %74 = arith.maximumf %72, %73 : vector<8x64xf32>
    %cst_33 = arith.constant dense<0.000000e+00> : vector<8x32xf32>
    %75 = tpu.matmul %74, %7, %cst_33 {dimension_numbers = #tpu.dot_dimension_numbers<[1], [0], [0], [1], [0, 0, 1, 1], [], []>} : vector<8x64xf32>, vector<64x32xf32>, vector<8x32xf32> -> vector<8x32xf32>
    %76 = vector.broadcast %11 : vector<1x32xf32> to vector<8x32xf32>
    %77 = arith.addf %75, %76 : vector<8x32xf32>
    %78 = arith.addf %69, %77 : vector<8x32xf32>
    %cst_34 = arith.constant dense<0.000000e+00> : vector<8xf32>
    %79 = vector.multi_reduction <add>, %78, %cst_34 [1] : vector<8x32xf32> to vector<8xf32>
    %80 = vector.shape_cast %79 : vector<8xf32> to vector<8x1xf32>
    %cst_35 = arith.constant 3.200000e+01 : f32
    %81 = vector.broadcast %cst_35 : f32 to vector<8x1xf32>
    %82 = arith.divf %80, %81 : vector<8x1xf32>
    %83 = vector.broadcast %82 : vector<8x1xf32> to vector<8x32xf32>
    %84 = arith.subf %78, %83 : vector<8x32xf32>
    %85 = arith.mulf %84, %84 : vector<8x32xf32>
    %cst_36 = arith.constant dense<0.000000e+00> : vector<8xf32>
    %86 = vector.multi_reduction <add>, %85, %cst_36 [1] : vector<8x32xf32> to vector<8xf32>
    %87 = vector.shape_cast %86 : vector<8xf32> to vector<8x1xf32>
    %cst_37 = arith.constant 3.200000e+01 : f32
    %88 = vector.broadcast %cst_37 : f32 to vector<8x1xf32>
    %89 = arith.divf %87, %88 : vector<8x1xf32>
    %90 = vector.broadcast %82 : vector<8x1xf32> to vector<8x32xf32>
    %91 = arith.subf %78, %90 : vector<8x32xf32>
    %cst_38 = arith.constant 9.99999974E-6 : f32
    %92 = vector.broadcast %cst_38 : f32 to vector<8x1xf32>
    %93 = arith.addf %89, %92 : vector<8x1xf32>
    %94 = math.rsqrt %93 : vector<8x1xf32>
    %95 = vector.broadcast %94 : vector<8x1xf32> to vector<8x32xf32>
    %96 = arith.mulf %91, %95 : vector<8x32xf32>
    %97 = vector.broadcast %14 : vector<1x32xf32> to vector<8x32xf32>
    %98 = arith.mulf %96, %97 : vector<8x32xf32>
    %99 = vector.broadcast %15 : vector<1x32xf32> to vector<8x32xf32>
    %100 = arith.addf %98, %99 : vector<8x32xf32>
    %101 = vector.shape_cast %100 : vector<8x32xf32> to vector<1x8x32xf32>
    %102 = vector.shape_cast %101 : vector<1x8x32xf32> to vector<1x8x32xf32>
    %103 = vector.broadcast %102 : vector<1x8x32xf32> to vector<4x8x32xf32>
    "tpu.trace_start"() <{level = 10 : i32, message = "hse,hed->hsd"}> : () -> ()
    %cst_39 = arith.constant dense<0.000000e+00> : vector<4x8x24xf32>
    %104 = tpu.matmul %103, %3, %cst_39 {dimension_numbers = #tpu.dot_dimension_numbers<[2], [1], [1], [2], [0, 0, 0, 1, 1, 2], [0], [0]>} : vector<4x8x32xf32>, vector<4x32x24xf32>, vector<4x8x24xf32> -> vector<4x8x24xf32>
    "tpu.trace_stop"() : () -> ()
    %105 = vector.broadcast %4 : vector<4x1x24xf32> to vector<4x8x24xf32>
    %106 = arith.addf %104, %105 : vector<4x8x24xf32>
    %107 = vector.extract_strided_slice %106 {offsets = [0, 0, 0], sizes = [4, 8, 8], strides = [1, 1, 1]} : vector<4x8x24xf32> to vector<4x8x8xf32>
    %108 = vector.extract_strided_slice %106 {offsets = [0, 0, 8], sizes = [4, 8, 8], strides = [1, 1, 1]} : vector<4x8x24xf32> to vector<4x8x8xf32>
    %109 = vector.extract_strided_slice %106 {offsets = [0, 0, 16], sizes = [4, 8, 8], strides = [1, 1, 1]} : vector<4x8x24xf32> to vector<4x8x8xf32>
    "tpu.trace_start"() <{level = 10 : i32, message = "hqd,hkd->hqk"}> : () -> ()
    %cst_40 = arith.constant dense<0.000000e+00> : vector<4x8x8xf32>
    %110 = tpu.matmul %107, %108, %cst_40 {dimension_numbers = #tpu.dot_dimension_numbers<[2], [2], [1], [1], [0, 0, 0, 1, 1, 1], [0], [0]>} : vector<4x8x8xf32>, vector<4x8x8xf32>, vector<4x8x8xf32> -> vector<4x8x8xf32>
    "tpu.trace_stop"() : () -> ()
    %111 = vector.shape_cast %2 : vector<8x8xf32> to vector<1x8x8xf32>
    %112 = vector.broadcast %111 : vector<1x8x8xf32> to vector<4x8x8xf32>
    %113 = arith.addf %110, %112 : vector<4x8x8xf32>
    %cst_41 = arith.constant dense<0xFF800000> : vector<4x8xf32>
    %114 = vector.multi_reduction <maximumf>, %113, %cst_41 [2] : vector<4x8x8xf32> to vector<4x8xf32>
    %115 = vector.shape_cast %114 : vector<4x8xf32> to vector<4x8x1xf32>
    %116 = vector.broadcast %115 : vector<4x8x1xf32> to vector<4x8x8xf32>
    %117 = arith.subf %113, %116 : vector<4x8x8xf32>
    %118 = math.exp %117 : vector<4x8x8xf32>
    %cst_42 = arith.constant dense<0.000000e+00> : vector<4x8xf32>
    %119 = vector.multi_reduction <add>, %118, %cst_42 [2] : vector<4x8x8xf32> to vector<4x8xf32>
    %120 = vector.shape_cast %119 : vector<4x8xf32> to vector<4x8x1xf32>
    %cst_43 = arith.constant 1.000000e+00 : f32
    %121 = vector.broadcast %cst_43 : f32 to vector<4x8x1xf32>
    %122 = arith.divf %121, %120 : vector<4x8x1xf32>
    %123 = vector.broadcast %122 : vector<4x8x1xf32> to vector<4x8x8xf32>
    %124 = arith.mulf %118, %123 : vector<4x8x8xf32>
    "tpu.trace_start"() <{level = 10 : i32, message = "hqk,hkd->hqd"}> : () -> ()
    %cst_44 = arith.constant dense<0.000000e+00> : vector<4x8x8xf32>
    %125 = tpu.matmul %124, %109, %cst_44 {dimension_numbers = #tpu.dot_dimension_numbers<[2], [1], [1], [2], [0, 0, 0, 1, 1, 2], [0], [0]>} : vector<4x8x8xf32>, vector<4x8x8xf32>, vector<4x8x8xf32> -> vector<4x8x8xf32>
    "tpu.trace_stop"() : () -> ()
    "tpu.trace_start"() <{level = 10 : i32, message = "hsd,hde->hse"}> : () -> ()
    %cst_45 = arith.constant dense<0.000000e+00> : vector<4x8x32xf32>
    %126 = tpu.matmul %125, %5, %cst_45 {dimension_numbers = #tpu.dot_dimension_numbers<[2], [1], [1], [2], [0, 0, 0, 1, 1, 2], [0], [0]>} : vector<4x8x8xf32>, vector<4x8x32xf32>, vector<4x8x32xf32> -> vector<4x8x32xf32>
    "tpu.trace_stop"() : () -> ()
    %cst_46 = arith.constant dense<0.000000e+00> : vector<8x32xf32>
    %127 = vector.multi_reduction <add>, %126, %cst_46 [0] : vector<4x8x32xf32> to vector<8x32xf32>
    %128 = vector.broadcast %9 : vector<1x32xf32> to vector<8x32xf32>
    %129 = arith.addf %127, %128 : vector<8x32xf32>
    %130 = arith.addf %100, %129 : vector<8x32xf32>
    %cst_47 = arith.constant dense<0.000000e+00> : vector<8xf32>
    %131 = vector.multi_reduction <add>, %130, %cst_47 [1] : vector<8x32xf32> to vector<8xf32>
    %132 = vector.shape_cast %131 : vector<8xf32> to vector<8x1xf32>
    %cst_48 = arith.constant 3.200000e+01 : f32
    %133 = vector.broadcast %cst_48 : f32 to vector<8x1xf32>
    %134 = arith.divf %132, %133 : vector<8x1xf32>
    %135 = vector.broadcast %134 : vector<8x1xf32> to vector<8x32xf32>
    %136 = arith.subf %130, %135 : vector<8x32xf32>
    %137 = arith.mulf %136, %136 : vector<8x32xf32>
    %cst_49 = arith.constant dense<0.000000e+00> : vector<8xf32>
    %138 = vector.multi_reduction <add>, %137, %cst_49 [1] : vector<8x32xf32> to vector<8xf32>
    %139 = vector.shape_cast %138 : vector<8xf32> to vector<8x1xf32>
    %cst_50 = arith.constant 3.200000e+01 : f32
    %140 = vector.broadcast %cst_50 : f32 to vector<8x1xf32>
    %141 = arith.divf %139, %140 : vector<8x1xf32>
    %142 = vector.broadcast %134 : vector<8x1xf32> to vector<8x32xf32>
    %143 = arith.subf %130, %142 : vector<8x32xf32>
    %cst_51 = arith.constant 9.99999974E-6 : f32
    %144 = vector.broadcast %cst_51 : f32 to vector<8x1xf32>
    %145 = arith.addf %141, %144 : vector<8x1xf32>
    %146 = math.rsqrt %145 : vector<8x1xf32>
    %147 = vector.broadcast %146 : vector<8x1xf32> to vector<8x32xf32>
    %148 = arith.mulf %143, %147 : vector<8x32xf32>
    %149 = vector.broadcast %12 : vector<1x32xf32> to vector<8x32xf32>
    %150 = arith.mulf %148, %149 : vector<8x32xf32>
    %151 = vector.broadcast %13 : vector<1x32xf32> to vector<8x32xf32>
    %152 = arith.addf %150, %151 : vector<8x32xf32>
    %cst_52 = arith.constant dense<0.000000e+00> : vector<8x64xf32>
    %153 = tpu.matmul %152, %6, %cst_52 {dimension_numbers = #tpu.dot_dimension_numbers<[1], [0], [0], [1], [0, 0, 1, 1], [], []>} : vector<8x32xf32>, vector<32x64xf32>, vector<8x64xf32> -> vector<8x64xf32>
    %154 = vector.broadcast %10 : vector<1x64xf32> to vector<8x64xf32>
    %155 = arith.addf %153, %154 : vector<8x64xf32>
    %cst_53 = arith.constant 0.000000e+00 : f32
    %156 = vector.broadcast %cst_53 : f32 to vector<8x64xf32>
    %157 = arith.maximumf %155, %156 : vector<8x64xf32>
    %cst_54 = arith.constant dense<0.000000e+00> : vector<8x32xf32>
    %158 = tpu.matmul %157, %7, %cst_54 {dimension_numbers = #tpu.dot_dimension_numbers<[1], [0], [0], [1], [0, 0, 1, 1], [], []>} : vector<8x64xf32>, vector<64x32xf32>, vector<8x32xf32> -> vector<8x32xf32>
    %159 = vector.broadcast %11 : vector<1x32xf32> to vector<8x32xf32>
    %160 = arith.addf %158, %159 : vector<8x32xf32>
    %161 = arith.addf %152, %160 : vector<8x32xf32>
    %cst_55 = arith.constant dense<0.000000e+00> : vector<8xf32>
    %162 = vector.multi_reduction <add>, %161, %cst_55 [1] : vector<8x32xf32> to vector<8xf32>
    %163 = vector.shape_cast %162 : vector<8xf32> to vector<8x1xf32>
    %cst_56 = arith.constant 3.200000e+01 : f32
    %164 = vector.broadcast %cst_56 : f32 to vector<8x1xf32>
    %165 = arith.divf %163, %164 : vector<8x1xf32>
    %166 = vector.broadcast %165 : vector<8x1xf32> to vector<8x32xf32>
    %167 = arith.subf %161, %166 : vector<8x32xf32>
    %168 = arith.mulf %167, %167 : vector<8x32xf32>
    %cst_57 = arith.constant dense<0.000000e+00> : vector<8xf32>
    %169 = vector.multi_reduction <add>, %168, %cst_57 [1] : vector<8x32xf32> to vector<8xf32>
    %170 = vector.shape_cast %169 : vector<8xf32> to vector<8x1xf32>
    %cst_58 = arith.constant 3.200000e+01 : f32
    %171 = vector.broadcast %cst_58 : f32 to vector<8x1xf32>
    %172 = arith.divf %170, %171 : vector<8x1xf32>
    %173 = vector.broadcast %165 : vector<8x1xf32> to vector<8x32xf32>
    %174 = arith.subf %161, %173 : vector<8x32xf32>
    %cst_59 = arith.constant 9.99999974E-6 : f32
    %175 = vector.broadcast %cst_59 : f32 to vector<8x1xf32>
    %176 = arith.addf %172, %175 : vector<8x1xf32>
    %177 = math.rsqrt %176 : vector<8x1xf32>
    %178 = vector.broadcast %177 : vector<8x1xf32> to vector<8x32xf32>
    %179 = arith.mulf %174, %178 : vector<8x32xf32>
    %180 = vector.broadcast %14 : vector<1x32xf32> to vector<8x32xf32>
    %181 = arith.mulf %179, %180 : vector<8x32xf32>
    %182 = vector.broadcast %15 : vector<1x32xf32> to vector<8x32xf32>
    %183 = arith.addf %181, %182 : vector<8x32xf32>
    %184 = vector.shape_cast %183 : vector<8x32xf32> to vector<1x8x32xf32>
    %185 = vector.shape_cast %184 : vector<1x8x32xf32> to vector<1x8x32xf32>
    %186 = vector.broadcast %185 : vector<1x8x32xf32> to vector<4x8x32xf32>
    "tpu.trace_start"() <{level = 10 : i32, message = "hse,hed->hsd"}> : () -> ()
    %cst_60 = arith.constant dense<0.000000e+00> : vector<4x8x24xf32>
    %187 = tpu.matmul %186, %3, %cst_60 {dimension_numbers = #tpu.dot_dimension_numbers<[2], [1], [1], [2], [0, 0, 0, 1, 1, 2], [0], [0]>} : vector<4x8x32xf32>, vector<4x32x24xf32>, vector<4x8x24xf32> -> vector<4x8x24xf32>
    "tpu.trace_stop"() : () -> ()
    %188 = vector.broadcast %4 : vector<4x1x24xf32> to vector<4x8x24xf32>
    %189 = arith.addf %187, %188 : vector<4x8x24xf32>
    %190 = vector.extract_strided_slice %189 {offsets = [0, 0, 0], sizes = [4, 8, 8], strides = [1, 1, 1]} : vector<4x8x24xf32> to vector<4x8x8xf32>
    %191 = vector.extract_strided_slice %189 {offsets = [0, 0, 8], sizes = [4, 8, 8], strides = [1, 1, 1]} : vector<4x8x24xf32> to vector<4x8x8xf32>
    %192 = vector.extract_strided_slice %189 {offsets = [0, 0, 16], sizes = [4, 8, 8], strides = [1, 1, 1]} : vector<4x8x24xf32> to vector<4x8x8xf32>
    "tpu.trace_start"() <{level = 10 : i32, message = "hqd,hkd->hqk"}> : () -> ()
    %cst_61 = arith.constant dense<0.000000e+00> : vector<4x8x8xf32>
    %193 = tpu.matmul %190, %191, %cst_61 {dimension_numbers = #tpu.dot_dimension_numbers<[2], [2], [1], [1], [0, 0, 0, 1, 1, 1], [0], [0]>} : vector<4x8x8xf32>, vector<4x8x8xf32>, vector<4x8x8xf32> -> vector<4x8x8xf32>
    "tpu.trace_stop"() : () -> ()
    %194 = vector.shape_cast %2 : vector<8x8xf32> to vector<1x8x8xf32>
    %195 = vector.broadcast %194 : vector<1x8x8xf32> to vector<4x8x8xf32>
    %196 = arith.addf %193, %195 : vector<4x8x8xf32>
    %cst_62 = arith.constant dense<0xFF800000> : vector<4x8xf32>
    %197 = vector.multi_reduction <maximumf>, %196, %cst_62 [2] : vector<4x8x8xf32> to vector<4x8xf32>
    %198 = vector.shape_cast %197 : vector<4x8xf32> to vector<4x8x1xf32>
    %199 = vector.broadcast %198 : vector<4x8x1xf32> to vector<4x8x8xf32>
    %200 = arith.subf %196, %199 : vector<4x8x8xf32>
    %201 = math.exp %200 : vector<4x8x8xf32>
    %cst_63 = arith.constant dense<0.000000e+00> : vector<4x8xf32>
    %202 = vector.multi_reduction <add>, %201, %cst_63 [2] : vector<4x8x8xf32> to vector<4x8xf32>
    %203 = vector.shape_cast %202 : vector<4x8xf32> to vector<4x8x1xf32>
    %cst_64 = arith.constant 1.000000e+00 : f32
    %204 = vector.broadcast %cst_64 : f32 to vector<4x8x1xf32>
    %205 = arith.divf %204, %203 : vector<4x8x1xf32>
    %206 = vector.broadcast %205 : vector<4x8x1xf32> to vector<4x8x8xf32>
    %207 = arith.mulf %201, %206 : vector<4x8x8xf32>
    "tpu.trace_start"() <{level = 10 : i32, message = "hqk,hkd->hqd"}> : () -> ()
    %cst_65 = arith.constant dense<0.000000e+00> : vector<4x8x8xf32>
    %208 = tpu.matmul %207, %192, %cst_65 {dimension_numbers = #tpu.dot_dimension_numbers<[2], [1], [1], [2], [0, 0, 0, 1, 1, 2], [0], [0]>} : vector<4x8x8xf32>, vector<4x8x8xf32>, vector<4x8x8xf32> -> vector<4x8x8xf32>
    "tpu.trace_stop"() : () -> ()
    "tpu.trace_start"() <{level = 10 : i32, message = "hsd,hde->hse"}> : () -> ()
    %cst_66 = arith.constant dense<0.000000e+00> : vector<4x8x32xf32>
    %209 = tpu.matmul %208, %5, %cst_66 {dimension_numbers = #tpu.dot_dimension_numbers<[2], [1], [1], [2], [0, 0, 0, 1, 1, 2], [0], [0]>} : vector<4x8x8xf32>, vector<4x8x32xf32>, vector<4x8x32xf32> -> vector<4x8x32xf32>
    "tpu.trace_stop"() : () -> ()
    %cst_67 = arith.constant dense<0.000000e+00> : vector<8x32xf32>
    %210 = vector.multi_reduction <add>, %209, %cst_67 [0] : vector<4x8x32xf32> to vector<8x32xf32>
    %211 = vector.broadcast %9 : vector<1x32xf32> to vector<8x32xf32>
    %212 = arith.addf %210, %211 : vector<8x32xf32>
    %213 = arith.addf %183, %212 : vector<8x32xf32>
    %cst_68 = arith.constant dense<0.000000e+00> : vector<8xf32>
    %214 = vector.multi_reduction <add>, %213, %cst_68 [1] : vector<8x32xf32> to vector<8xf32>
    %215 = vector.shape_cast %214 : vector<8xf32> to vector<8x1xf32>
    %cst_69 = arith.constant 3.200000e+01 : f32
    %216 = vector.broadcast %cst_69 : f32 to vector<8x1xf32>
    %217 = arith.divf %215, %216 : vector<8x1xf32>
    %218 = vector.broadcast %217 : vector<8x1xf32> to vector<8x32xf32>
    %219 = arith.subf %213, %218 : vector<8x32xf32>
    %220 = arith.mulf %219, %219 : vector<8x32xf32>
    %cst_70 = arith.constant dense<0.000000e+00> : vector<8xf32>
    %221 = vector.multi_reduction <add>, %220, %cst_70 [1] : vector<8x32xf32> to vector<8xf32>
    %222 = vector.shape_cast %221 : vector<8xf32> to vector<8x1xf32>
    %cst_71 = arith.constant 3.200000e+01 : f32
    %223 = vector.broadcast %cst_71 : f32 to vector<8x1xf32>
    %224 = arith.divf %222, %223 : vector<8x1xf32>
    %225 = vector.broadcast %217 : vector<8x1xf32> to vector<8x32xf32>
    %226 = arith.subf %213, %225 : vector<8x32xf32>
    %cst_72 = arith.constant 9.99999974E-6 : f32
    %227 = vector.broadcast %cst_72 : f32 to vector<8x1xf32>
    %228 = arith.addf %224, %227 : vector<8x1xf32>
    %229 = math.rsqrt %228 : vector<8x1xf32>
    %230 = vector.broadcast %229 : vector<8x1xf32> to vector<8x32xf32>
    %231 = arith.mulf %226, %230 : vector<8x32xf32>
    %232 = vector.broadcast %12 : vector<1x32xf32> to vector<8x32xf32>
    %233 = arith.mulf %231, %232 : vector<8x32xf32>
    %234 = vector.broadcast %13 : vector<1x32xf32> to vector<8x32xf32>
    %235 = arith.addf %233, %234 : vector<8x32xf32>
    %cst_73 = arith.constant dense<0.000000e+00> : vector<8x64xf32>
    %236 = tpu.matmul %235, %6, %cst_73 {dimension_numbers = #tpu.dot_dimension_numbers<[1], [0], [0], [1], [0, 0, 1, 1], [], []>} : vector<8x32xf32>, vector<32x64xf32>, vector<8x64xf32> -> vector<8x64xf32>
    %237 = vector.broadcast %10 : vector<1x64xf32> to vector<8x64xf32>
    %238 = arith.addf %236, %237 : vector<8x64xf32>
    %cst_74 = arith.constant 0.000000e+00 : f32
    %239 = vector.broadcast %cst_74 : f32 to vector<8x64xf32>
    %240 = arith.maximumf %238, %239 : vector<8x64xf32>
    %cst_75 = arith.constant dense<0.000000e+00> : vector<8x32xf32>
    %241 = tpu.matmul %240, %7, %cst_75 {dimension_numbers = #tpu.dot_dimension_numbers<[1], [0], [0], [1], [0, 0, 1, 1], [], []>} : vector<8x64xf32>, vector<64x32xf32>, vector<8x32xf32> -> vector<8x32xf32>
    %242 = vector.broadcast %11 : vector<1x32xf32> to vector<8x32xf32>
    %243 = arith.addf %241, %242 : vector<8x32xf32>
    %244 = arith.addf %235, %243 : vector<8x32xf32>
    %cst_76 = arith.constant dense<0.000000e+00> : vector<8xf32>
    %245 = vector.multi_reduction <add>, %244, %cst_76 [1] : vector<8x32xf32> to vector<8xf32>
    %246 = vector.shape_cast %245 : vector<8xf32> to vector<8x1xf32>
    %cst_77 = arith.constant 3.200000e+01 : f32
    %247 = vector.broadcast %cst_77 : f32 to vector<8x1xf32>
    %248 = arith.divf %246, %247 : vector<8x1xf32>
    %249 = vector.broadcast %248 : vector<8x1xf32> to vector<8x32xf32>
    %250 = arith.subf %244, %249 : vector<8x32xf32>
    %251 = arith.mulf %250, %250 : vector<8x32xf32>
    %cst_78 = arith.constant dense<0.000000e+00> : vector<8xf32>
    %252 = vector.multi_reduction <add>, %251, %cst_78 [1] : vector<8x32xf32> to vector<8xf32>
    %253 = vector.shape_cast %252 : vector<8xf32> to vector<8x1xf32>
    %cst_79 = arith.constant 3.200000e+01 : f32
    %254 = vector.broadcast %cst_79 : f32 to vector<8x1xf32>
    %255 = arith.divf %253, %254 : vector<8x1xf32>
    %256 = vector.broadcast %248 : vector<8x1xf32> to vector<8x32xf32>
    %257 = arith.subf %244, %256 : vector<8x32xf32>
    %cst_80 = arith.constant 9.99999974E-6 : f32
    %258 = vector.broadcast %cst_80 : f32 to vector<8x1xf32>
    %259 = arith.addf %255, %258 : vector<8x1xf32>
    %260 = math.rsqrt %259 : vector<8x1xf32>
    %261 = vector.broadcast %260 : vector<8x1xf32> to vector<8x32xf32>
    %262 = arith.mulf %257, %261 : vector<8x32xf32>
    %263 = vector.broadcast %14 : vector<1x32xf32> to vector<8x32xf32>
    %264 = arith.mulf %262, %263 : vector<8x32xf32>
    %265 = vector.broadcast %15 : vector<1x32xf32> to vector<8x32xf32>
    %266 = arith.addf %264, %265 : vector<8x32xf32>
    %cst_81 = arith.constant dense<0.000000e+00> : vector<8xf32>
    %267 = vector.multi_reduction <add>, %266, %cst_81 [1] : vector<8x32xf32> to vector<8xf32>
    %268 = vector.shape_cast %267 : vector<8xf32> to vector<8x1xf32>
    %cst_82 = arith.constant 3.200000e+01 : f32
    %269 = vector.broadcast %cst_82 : f32 to vector<8x1xf32>
    %270 = arith.divf %268, %269 : vector<8x1xf32>
    %271 = vector.broadcast %270 : vector<8x1xf32> to vector<8x32xf32>
    %272 = arith.subf %266, %271 : vector<8x32xf32>
    %273 = arith.mulf %272, %272 : vector<8x32xf32>
    %cst_83 = arith.constant dense<0.000000e+00> : vector<8xf32>
    %274 = vector.multi_reduction <add>, %273, %cst_83 [1] : vector<8x32xf32> to vector<8xf32>
    %275 = vector.shape_cast %274 : vector<8xf32> to vector<8x1xf32>
    %cst_84 = arith.constant 3.200000e+01 : f32
    %276 = vector.broadcast %cst_84 : f32 to vector<8x1xf32>
    %277 = arith.divf %275, %276 : vector<8x1xf32>
    %278 = vector.broadcast %270 : vector<8x1xf32> to vector<8x32xf32>
    %279 = arith.subf %266, %278 : vector<8x32xf32>
    %cst_85 = arith.constant 9.99999974E-6 : f32
    %280 = vector.broadcast %cst_85 : f32 to vector<8x1xf32>
    %281 = arith.addf %277, %280 : vector<8x1xf32>
    %282 = math.rsqrt %281 : vector<8x1xf32>
    %283 = vector.broadcast %282 : vector<8x1xf32> to vector<8x32xf32>
    %284 = arith.mulf %279, %283 : vector<8x32xf32>
    %285 = vector.broadcast %16 : vector<1x32xf32> to vector<8x32xf32>
    %286 = arith.mulf %284, %285 : vector<8x32xf32>
    %287 = vector.broadcast %17 : vector<1x32xf32> to vector<8x32xf32>
    %288 = arith.addf %286, %287 : vector<8x32xf32>
    %c0_86 = arith.constant 0 : index
    %c0_87 = arith.constant 0 : index
    %c0_88 = arith.constant 0 : index
    %289 = vector.load %arg9[%c0_86, %c0_87, %c0_88] : memref<1x8x32xf32, #tpu.memory_space<vmem>>, vector<1x8x32xf32>
    %290 = vector.shape_cast %289 : vector<1x8x32xf32> to vector<8x32xf32>
    %291 = vector.shape_cast %288 : vector<8x32xf32> to vector<1x8x32xf32>
    tpu.vector_store %arg9[%c0_86, %c0_87, %c0_88], %291 {strides = array<i32>} : memref<1x8x32xf32, #tpu.memory_space<vmem>>, vector<1x8x32xf32>,
    return
  }
  func.func @transform_0(%arg0: i32) -> (i32, i32, i32) {
    %c0_i32 = arith.constant 0 : i32
    %c0_i32_0 = arith.constant 0 : i32
    %c0_i32_1 = arith.constant 0 : i32
    return %arg0, %c0_i32, %c0_i32_0 : i32, i32, i32
  }
  func.func @transform_1(%arg0: i32) -> (i32, i32) {
    %c0_i32 = arith.constant 0 : i32
    %c0_i32_0 = arith.constant 0 : i32
    %c0_i32_1 = arith.constant 0 : i32
    return %c0_i32, %c0_i32_0 : i32, i32
  }
  func.func @transform_2(%arg0: i32) -> (i32, i32, i32) {
    %c0_i32 = arith.constant 0 : i32
    %c0_i32_0 = arith.constant 0 : i32
    %c0_i32_1 = arith.constant 0 : i32
    %c0_i32_2 = arith.constant 0 : i32
    return %c0_i32, %c0_i32_0, %c0_i32_1 : i32, i32, i32
  }
  func.func @transform_3(%arg0: i32) -> (i32, i32, i32) {
    %c0_i32 = arith.constant 0 : i32
    %c0_i32_0 = arith.constant 0 : i32
    %c0_i32_1 = arith.constant 0 : i32
    %c0_i32_2 = arith.constant 0 : i32
    return %c0_i32, %c0_i32_0, %c0_i32_1 : i32, i32, i32
  }
  func.func @transform_4(%arg0: i32) -> (i32, i32, i32) {
    %c0_i32 = arith.constant 0 : i32
    %c0_i32_0 = arith.constant 0 : i32
    %c0_i32_1 = arith.constant 0 : i32
    %c0_i32_2 = arith.constant 0 : i32
    return %c0_i32, %c0_i32_0, %c0_i32_1 : i32, i32, i32
  }
  func.func @transform_5(%arg0: i32) -> (i32, i32) {
    %c0_i32 = arith.constant 0 : i32
    %c0_i32_0 = arith.constant 0 : i32
    %c0_i32_1 = arith.constant 0 : i32
    return %c0_i32, %c0_i32_0 : i32, i32
  }
  func.func @transform_6(%arg0: i32) -> (i32, i32) {
    %c0_i32 = arith.constant 0 : i32
    %c0_i32_0 = arith.constant 0 : i32
    %c0_i32_1 = arith.constant 0 : i32
    return %c0_i32, %c0_i32_0 : i32, i32
  }
  func.func @transform_7(%arg0: i32) -> (i32, i32) {
    %c0_i32 = arith.constant 0 : i32
    %c0_i32_0 = arith.constant 0 : i32
    %c0_i32_1 = arith.constant 0 : i32
    return %c0_i32, %c0_i32_0 : i32, i32
  }
  func.func @transform_8(%arg0: i32) -> (i32, i32, i32) {
    %c0_i32 = arith.constant 0 : i32
    %c0_i32_0 = arith.constant 0 : i32
    %c0_i32_1 = arith.constant 0 : i32
    return %arg0, %c0_i32, %c0_i32_0 : i32, i32, i32
  }
}

</mosaic_0001>

<llo_original>
// kernel: weight_sharing_encoder_forward.1
$region0: #{weight_sharing_encoder_forward.1}
  #allocation0 [shape = 'u32[]', space=smem, size = 0x4, offset = 0x4, fixed_abs, tag = 'smem constant byte address 0x4 - core index']
  #allocation1 [shape = 'u32[72,128]{1,0:T(1,128)}', space=vmem, size = 0x9000, scoped, tag = 'internal scratch']
  %s0 = inlined_call_operand.vmem [shape: f32[2,8,32], index: 0, kind: input, shape index: {}]
  %s1 = inlined_call_operand.vmem [shape: f32[8,8], index: 1, kind: input, shape index: {}]
  %s2 = inlined_call_operand.vmem [shape: f32[4,32,24], index: 2, kind: input, shape index: {}]
  %s3 = inlined_call_operand.vmem [shape: f32[4,1,24], index: 3, kind: input, shape index: {}]
  %s4 = inlined_call_operand.vmem [shape: f32[4,8,32], index: 4, kind: input, shape index: {}]
  %s5 = inlined_call_operand.vmem [shape: f32[32,64], index: 5, kind: input, shape index: {}]
  %s6 = inlined_call_operand.vmem [shape: f32[64,32], index: 6, kind: input, shape index: {}]
  %s7 = inlined_call_operand.vmem [shape: f32[9,128], index: 7, kind: input, shape index: {}]
  %s8 = inlined_call_operand.vmem [shape: f32[2,8,32], index: 8, kind: output, shape index: {}]
  %s9 = sld [smem:[#allocation0]]
  $region65: #{weight_sharing_encoder_forward.1} parent=0
    _
  %s11 = ssub.s32 1, %s9
  %s12 = scalar_select 0, %s11, %s9
  loop: start=0, step=1, limit=4
  $region2: #{weight_sharing_encoder_forward.1} parent=0 // loop_pre_header
    _
  $region3: #{weight_sharing_encoder_forward.1} parent=0 // loop_header
    %s14 = sphi 0, %s18
    %p15 = scmp.ge.s32.totalorder %s14, 4
    %s24 = sphi 0, %s26
    %s27 = sphi 0, %s24
    %s28 = sphi 0, %s27
    %s44 = sphi 0, %s28
    %s48 = sphi 0, %s48
    %s50 = sphi 0, %s48
    %s51 = sphi 0, %s50
    %s65 = sphi 0, %s51
    %s69 = sphi 0, %s69
    %s71 = sphi 0, %s69
    %s72 = sphi 0, %s71
    %s86 = sphi 0, %s72
    %s90 = sphi 0, %s90
    %s92 = sphi 0, %s90
    %s93 = sphi 0, %s92
    %s107 = sphi 0, %s93
    %s111 = sphi 0, %s111
    %s113 = sphi 0, %s111
    %s114 = sphi 0, %s113
    %s128 = sphi 0, %s114
    %s132 = sphi 0, %s132
    %s134 = sphi 0, %s132
    %s135 = sphi 0, %s134
    %s149 = sphi 0, %s135
    %s153 = sphi 0, %s153
    %s155 = sphi 0, %s153
    %s156 = sphi 0, %s155
    %s170 = sphi 0, %s156
    %s174 = sphi 0, %s174
    %s176 = sphi 0, %s174
    %s177 = sphi 0, %s176
    %s191 = sphi 0, %s177
    %s197 = sphi 0, %s199
    %s200 = sphi 0, %s197
    %s201 = sphi 0, %s200
    %s217 = sphi 0, %s201
  $region4: #{weight_sharing_encoder_forward.1} parent=0 // loop_header_branch
    %17 = sbr.rel (%p15) target = $region8
  $region5: #{weight_sharing_encoder_forward.1} parent=0 // loop_body
    %s19 = ssub.s32 %s14, 1
    %s20 = ssub.s32 %s14, 2
    %s21 = sadd.s32 %s14, 1
    %s22 = ssub.s32 %s14, %s21
    %p23 = scmp.eq.s32.totalorder %s22, 0
    %s25 = sadd.s32 %s24, 1
    %s26 = scalar_select %p23, %s24, %s25
    %p29 = pneg %p23
    %p30 = scmp.eq.s32.totalorder %s14, 1
    %p31 = por %p29, %p30
    %p32 = scmp.ne.s32.totalorder %s24, %s27
    %p33 = scmp.eq.s32.totalorder %s14, 0
    %p34 = por %p32, %p33
    %p35 = scmp.ne.s32.totalorder %s24, %s27
    %p36 = scmp.eq.s32.totalorder %s19, 1
    %p37 = por %p35, %p36
    %p38 = scmp.ne.s32.totalorder %s27, %s28
    %p39 = scmp.eq.s32.totalorder %s19, 0
    %p40 = por %p38, %p39
    %p41 = scmp.ne.s32.totalorder %s27, %s28
    %p42 = scmp.eq.s32.totalorder %s20, 1
    %p43 = por %p41, %p42
    %p45 = scmp.ne.s32.totalorder %s28, %s44
    %p46 = scmp.eq.s32.totalorder %s20, 0
    %p47 = por %p45, %p46
    %s49 = sadd.s32 %s48, 1
    %p52 = scmp.eq.s32.totalorder %s14, 1
    %p53 = scmp.ne.s32.totalorder %s48, %s50
    %p54 = scmp.eq.s32.totalorder %s14, 0
    %p55 = por %p53, %p54
    %p56 = scmp.ne.s32.totalorder %s48, %s50
    %p57 = scmp.eq.s32.totalorder %s19, 1
    %p58 = por %p56, %p57
    %p59 = scmp.ne.s32.totalorder %s50, %s51
    %p60 = scmp.eq.s32.totalorder %s19, 0
    %p61 = por %p59, %p60
    %p62 = scmp.ne.s32.totalorder %s50, %s51
    %p63 = scmp.eq.s32.totalorder %s20, 1
    %p64 = por %p62, %p63
    %p66 = scmp.ne.s32.totalorder %s51, %s65
    %p67 = scmp.eq.s32.totalorder %s20, 0
    %p68 = por %p66, %p67
    %s70 = sadd.s32 %s69, 1
    %p73 = scmp.eq.s32.totalorder %s14, 1
    %p74 = scmp.ne.s32.totalorder %s69, %s71
    %p75 = scmp.eq.s32.totalorder %s14, 0
    %p76 = por %p74, %p75
    %p77 = scmp.ne.s32.totalorder %s69, %s71
    %p78 = scmp.eq.s32.totalorder %s19, 1
    %p79 = por %p77, %p78
    %p80 = scmp.ne.s32.totalorder %s71, %s72
    %p81 = scmp.eq.s32.totalorder %s19, 0
    %p82 = por %p80, %p81
    %p83 = scmp.ne.s32.totalorder %s71, %s72
    %p84 = scmp.eq.s32.totalorder %s20, 1
    %p85 = por %p83, %p84
    %p87 = scmp.ne.s32.totalorder %s72, %s86
    %p88 = scmp.eq.s32.totalorder %s20, 0
    %p89 = por %p87, %p88
    %s91 = sadd.s32 %s90, 1
    %p94 = scmp.eq.s32.totalorder %s14, 1
    %p95 = scmp.ne.s32.totalorder %s90, %s92
    %p96 = scmp.eq.s32.totalorder %s14, 0
    %p97 = por %p95, %p96
    %p98 = scmp.ne.s32.totalorder %s90, %s92
    %p99 = scmp.eq.s32.totalorder %s19, 1
    %p100 = por %p98, %p99
    %p101 = scmp.ne.s32.totalorder %s92, %s93
    %p102 = scmp.eq.s32.totalorder %s19, 0
    %p103 = por %p101, %p102
    %p104 = scmp.ne.s32.totalorder %s92, %s93
    %p105 = scmp.eq.s32.totalorder %s20, 1
    %p106 = por %p104, %p105
    %p108 = scmp.ne.s32.totalorder %s93, %s107
    %p109 = scmp.eq.s32.totalorder %s20, 0
    %p110 = por %p108, %p109
    %s112 = sadd.s32 %s111, 1
    %p115 = scmp.eq.s32.totalorder %s14, 1
    %p116 = scmp.ne.s32.totalorder %s111, %s113
    %p117 = scmp.eq.s32.totalorder %s14, 0
    %p118 = por %p116, %p117
    %p119 = scmp.ne.s32.totalorder %s111, %s113
    %p120 = scmp.eq.s32.totalorder %s19, 1
    %p121 = por %p119, %p120
    %p122 = scmp.ne.s32.totalorder %s113, %s114
    %p123 = scmp.eq.s32.totalorder %s19, 0
    %p124 = por %p122, %p123
    %p125 = scmp.ne.s32.totalorder %s113, %s114
    %p126 = scmp.eq.s32.totalorder %s20, 1
    %p127 = por %p125, %p126
    %p129 = scmp.ne.s32.totalorder %s114, %s128
    %p130 = scmp.eq.s32.totalorder %s20, 0
    %p131 = por %p129, %p130
    %s133 = sadd.s32 %s132, 1
    %p136 = scmp.eq.s32.totalorder %s14, 1
    %p137 = scmp.ne.s32.totalorder %s132, %s134
    %p138 = scmp.eq.s32.totalorder %s14, 0
    %p139 = por %p137, %p138
    %p140 = scmp.ne.s32.totalorder %s132, %s134
    %p141 = scmp.eq.s32.totalorder %s19, 1
    %p142 = por %p140, %p141
    %p143 = scmp.ne.s32.totalorder %s134, %s135
    %p144 = scmp.eq.s32.totalorder %s19, 0
    %p145 = por %p143, %p144
    %p146 = scmp.ne.s32.totalorder %s134, %s135
    %p147 = scmp.eq.s32.totalorder %s20, 1
    %p148 = por %p146, %p147
    %p150 = scmp.ne.s32.totalorder %s135, %s149
    %p151 = scmp.eq.s32.totalorder %s20, 0
    %p152 = por %p150, %p151
    %s154 = sadd.s32 %s153, 1
    %p157 = scmp.eq.s32.totalorder %s14, 1
    %p158 = scmp.ne.s32.totalorder %s153, %s155
    %p159 = scmp.eq.s32.totalorder %s14, 0
    %p160 = por %p158, %p159
    %p161 = scmp.ne.s32.totalorder %s153, %s155
    %p162 = scmp.eq.s32.totalorder %s19, 1
    %p163 = por %p161, %p162
    %p164 = scmp.ne.s32.totalorder %s155, %s156
    %p165 = scmp.eq.s32.totalorder %s19, 0
    %p166 = por %p164, %p165
    %p167 = scmp.ne.s32.totalorder %s155, %s156
    %p168 = scmp.eq.s32.totalorder %s20, 1
    %p169 = por %p167, %p168
    %p171 = scmp.ne.s32.totalorder %s156, %s170
    %p172 = scmp.eq.s32.totalorder %s20, 0
    %p173 = por %p171, %p172
    %s175 = sadd.s32 %s174, 1
    %p178 = scmp.eq.s32.totalorder %s14, 1
    %p179 = scmp.ne.s32.totalorder %s174, %s176
    %p180 = scmp.eq.s32.totalorder %s14, 0
    %p181 = por %p179, %p180
    %p182 = scmp.ne.s32.totalorder %s174, %s176
    %p183 = scmp.eq.s32.totalorder %s19, 1
    %p184 = por %p182, %p183
    %p185 = scmp.ne.s32.totalorder %s176, %s177
    %p186 = scmp.eq.s32.totalorder %s19, 0
    %p187 = por %p185, %p186
    %p188 = scmp.ne.s32.totalorder %s176, %s177
    %p189 = scmp.eq.s32.totalorder %s20, 1
    %p190 = por %p188, %p189
    %p192 = scmp.ne.s32.totalorder %s177, %s191
    %p193 = scmp.eq.s32.totalorder %s20, 0
    %p194 = por %p192, %p193
    %s195 = ssub.s32 %s14, %s21
    %p196 = scmp.eq.s32.totalorder %s195, 0
    %s198 = sadd.s32 %s197, 1
    %s199 = scalar_select %p196, %s197, %s198
    %p202 = pneg %p196
    %p203 = scmp.eq.s32.totalorder %s14, 1
    %p204 = por %p202, %p203
    %p205 = scmp.ne.s32.totalorder %s197, %s200
    %p206 = scmp.eq.s32.totalorder %s14, 0
    %p207 = por %p205, %p206
    %p208 = scmp.ne.s32.totalorder %s197, %s200
    %p209 = scmp.eq.s32.totalorder %s19, 1
    %p210 = por %p208, %p209
    %p211 = scmp.ne.s32.totalorder %s200, %s201
    %p212 = scmp.eq.s32.totalorder %s19, 0
    %p213 = por %p211, %p212
    %p214 = scmp.ne.s32.totalorder %s200, %s201
    %p215 = scmp.eq.s32.totalorder %s20, 1
    %p216 = por %p214, %p215
    %p218 = scmp.ne.s32.totalorder %s201, %s217
    %p219 = scmp.eq.s32.totalorder %s20, 0
    %p220 = por %p218, %p219
    %p221 = scmp.le.s32.totalorder 1, %s14
    %p222 = scmp.lt.s32.totalorder %s14, 3
    %p223 = pnand %p221, %p222
    %p224 = pneg %p223
    // Predicated region
    $region9: #{weight_sharing_encoder_forward.1} parent=5 // pred_check
      _
    $region10: #{weight_sharing_encoder_forward.1} parent=5 // pred_check_branch
      %226 = sbr.rel (%p223) target = $region12
    $region11: #{weight_sharing_encoder_forward.1} parent=5 // pred_region
      %s227 = ssub.s32 %s14, 1
      // Predicated region
      $region13: #{weight_sharing_encoder_forward.1} parent=11 // pred_check
        %p228 = pneg %p61
      $region14: #{weight_sharing_encoder_forward.1} parent=11 // pred_check_branch
        %230 = sbr.rel (%p228) target = $region16
      $region15: #{weight_sharing_encoder_forward.1} parent=11 // pred_region
        _
      $region16: #{weight_sharing_encoder_forward.1} parent=11 // pred_fallthru
        _
      // Predicated region
      $region17: #{weight_sharing_encoder_forward.1} parent=11 // pred_check
        %p231 = pneg %p82
      $region18: #{weight_sharing_encoder_forward.1} parent=11 // pred_check_branch
        %233 = sbr.rel (%p231) target = $region20
      $region19: #{weight_sharing_encoder_forward.1} parent=11 // pred_region
        _
      $region20: #{weight_sharing_encoder_forward.1} parent=11 // pred_fallthru
        _
      // Predicated region
      $region21: #{weight_sharing_encoder_forward.1} parent=11 // pred_check
        %p234 = pneg %p103
      $region22: #{weight_sharing_encoder_forward.1} parent=11 // pred_check_branch
        %236 = sbr.rel (%p234) target = $region24
      $region23: #{weight_sharing_encoder_forward.1} parent=11 // pred_region
        _
      $region24: #{weight_sharing_encoder_forward.1} parent=11 // pred_fallthru
        _
      // Predicated region
      $region25: #{weight_sharing_encoder_forward.1} parent=11 // pred_check
        %p237 = pneg %p124
      $region26: #{weight_sharing_encoder_forward.1} parent=11 // pred_check_branch
        %239 = sbr.rel (%p237) target = $region28
      $region27: #{weight_sharing_encoder_forward.1} parent=11 // pred_region
        _
      $region28: #{weight_sharing_encoder_forward.1} parent=11 // pred_fallthru
        _
      // Predicated region
      $region29: #{weight_sharing_encoder_forward.1} parent=11 // pred_check
        %p240 = pneg %p145
      $region30: #{weight_sharing_encoder_forward.1} parent=11 // pred_check_branch
        %242 = sbr.rel (%p240) target = $region32
      $region31: #{weight_sharing_encoder_forward.1} parent=11 // pred_region
        _
      $region32: #{weight_sharing_encoder_forward.1} parent=11 // pred_fallthru
        _
      // Predicated region
      $region33: #{weight_sharing_encoder_forward.1} parent=11 // pred_check
        %p243 = pneg %p166
      $region34: #{weight_sharing_encoder_forward.1} parent=11 // pred_check_branch
        %245 = sbr.rel (%p243) target = $region36
      $region35: #{weight_sharing_encoder_forward.1} parent=11 // pred_region
        _
      $region36: #{weight_sharing_encoder_forward.1} parent=11 // pred_fallthru
        _
      // Predicated region
      $region37: #{weight_sharing_encoder_forward.1} parent=11 // pred_check
        %p246 = pneg %p187
      $region38: #{weight_sharing_encoder_forward.1} parent=11 // pred_check_branch
        %248 = sbr.rel (%p246) target = $region40
      $region39: #{weight_sharing_encoder_forward.1} parent=11 // pred_region
        _
      $region40: #{weight_sharing_encoder_forward.1} parent=11 // pred_fallthru
        _
    $region12: #{weight_sharing_encoder_forward.1} parent=5 // pred_fallthru
      _
    %p249 = scmp.lt.s32.totalorder %s14, 2
    // Predicated region
    $region41: #{weight_sharing_encoder_forward.1} parent=5 // pred_check
      %p250 = pneg %p249
    $region42: #{weight_sharing_encoder_forward.1} parent=5 // pred_check_branch
      %252 = sbr.rel (%p250) target = $region44
    $region43: #{weight_sharing_encoder_forward.1} parent=5 // pred_region
      // Predicated region
      $region45: #{weight_sharing_encoder_forward.1} parent=43 // pred_check
        %p253 = pneg %p34
      $region46: #{weight_sharing_encoder_forward.1} parent=43 // pred_check_branch
        %255 = sbr.rel (%p253) target = $region48
      $region47: #{weight_sharing_encoder_forward.1} parent=43 // pred_region
        %p256 = scmp.lt.s32.totalorder %s14, 1
        %s257 = scalar_select %p256, %s14, 1
        %s258 = smul.addr %s257, 8
        %s259 = scalar_lea.vmem %s0, %s258
      $region48: #{weight_sharing_encoder_forward.1} parent=43 // pred_fallthru
        _
    $region44: #{weight_sharing_encoder_forward.1} parent=5 // pred_fallthru
      _
    %p260 = scmp.le.s32.totalorder 1, %s14
    %p261 = scmp.lt.s32.totalorder %s14, 3
    %p262 = pnand %p260, %p261
    %p263 = pneg %p262
    // Predicated region
    $region49: #{weight_sharing_encoder_forward.1} parent=5 // pred_check
      _
    $region50: #{weight_sharing_encoder_forward.1} parent=5 // pred_check_branch
      %265 = sbr.rel (%p262) target = $region52
    $region51: #{weight_sharing_encoder_forward.1} parent=5 // pred_region
      %s266 = ssub.s32 %s14, 1
      %p267 = scmp.lt.s32.totalorder %s19, 1
      %s268 = scalar_select %p267, %s19, 1
      %s269 = smul.addr %s268, 8
      %s270 = scalar_lea.vmem %s0, %s269
      %p271 = pneg %p40
      %p272 = pneg %p37
      %p273 = pneg %p61
      %p274 = pneg %p58
      %p275 = pneg %p82
      %p276 = pneg %p79
      %p277 = pneg %p103
      %p278 = pneg %p100
      %p279 = pneg %p124
      %p280 = pneg %p121
      %p281 = pneg %p145
      %p282 = pneg %p142
      %p283 = pneg %p166
      %p284 = pneg %p163
      %p285 = pneg %p187
      %p286 = pneg %p184
      %p287 = pneg %p213
      %p288 = pneg %p210
      %p289 = scmp.lt.s32.totalorder %s19, 1
      %s290 = scalar_select %p289, %s19, 1
      %s291 = smul.addr %s290, 8
      %s292 = scalar_lea.vmem %s8, %s291
      %p293 = scmp.lt.s32.totalorder %s19, 1
      %s294 = scalar_select %p293, %s19, 1
      %s295 = smul.addr %s294, 8
      %s296 = scalar_lea.vmem %s0, %s295
      %p297 = scmp.lt.s32.totalorder %s19, 1
      %s298 = scalar_select %p297, %s19, 1
      %s299 = smul.addr %s298, 8
      %s300 = scalar_lea.vmem %s8, %s299
      %v301 = vld [vmem:[%s296] sm:$0xff]
      %v302 = vld [vmem:[%s1] sm:$0xff]
      %v303 = vld [vmem:[%s2] sm:$0xff]
      %v304 = vld [vmem:[%s2 + $0x8] sm:$0xff]
      %v305 = vld [vmem:[%s2 + $0x10] sm:$0xff]
      %v306 = vld [vmem:[%s2 + $0x18] sm:$0xff]
      %v307 = vld [vmem:[%s2 + $0x20] sm:$0xff]
      %v308 = vld [vmem:[%s2 + $0x28] sm:$0xff]
      %v309 = vld [vmem:[%s2 + $0x30] sm:$0xff]
      %v310 = vld [vmem:[%s2 + $0x38] sm:$0xff]
      %v311 = vld [vmem:[%s2 + $0x40] sm:$0xff]
      %v312 = vld [vmem:[%s2 + $0x48] sm:$0xff]
      %v313 = vld [vmem:[%s2 + $0x50] sm:$0xff]
      %v314 = vld [vmem:[%s2 + $0x58] sm:$0xff]
      %v315 = vld [vmem:[%s2 + $0x60] sm:$0xff]
      %v316 = vld [vmem:[%s2 + $0x68] sm:$0xff]
      %v317 = vld [vmem:[%s2 + $0x70] sm:$0xff]
      %v318 = vld [vmem:[%s2 + $0x78] sm:$0xff]
      %v319 = vld [vmem:[%s3] sm:$0x1]
      %v320 = vld [vmem:[%s3 + $0x1] sm:$0x1]
      %v321 = vld [vmem:[%s3 + $0x2] sm:$0x1]
      %v322 = vld [vmem:[%s3 + $0x3] sm:$0x1]
      %v323 = vld [vmem:[%s4] sm:$0xff]
      %v324 = vld [vmem:[%s4 + $0x8] sm:$0xff]
      %v325 = vld [vmem:[%s4 + $0x10] sm:$0xff]
      %v326 = vld [vmem:[%s4 + $0x18] sm:$0xff]
      %v327 = vld [vmem:[%s5] sm:$0xff]
      %v328 = vld [vmem:[%s5 + $0x8] sm:$0xff]
      %v329 = vld [vmem:[%s5 + $0x10] sm:$0xff]
      %v330 = vld [vmem:[%s5 + $0x18] sm:$0xff]
      %v331 = vld [vmem:[%s6] sm:$0xff]
      %v332 = vld [vmem:[%s6 + $0x8] sm:$0xff]
      %v333 = vld [vmem:[%s6 + $0x10] sm:$0xff]
      %v334 = vld [vmem:[%s6 + $0x18] sm:$0xff]
      %v335 = vld [vmem:[%s6 + $0x20] sm:$0xff]
      %v336 = vld [vmem:[%s6 + $0x28] sm:$0xff]
      %v337 = vld [vmem:[%s6 + $0x30] sm:$0xff]
      %v338 = vld [vmem:[%s6 + $0x38] sm:$0xff]
      %v339 = vld [vmem:[%s7] sm:$0xff]
      %v340 = vld [vmem:[%s7 + $0x8] sm:$0x1]
      %v345 = vperm.slane %v319, 0
      %v346 = vperm.slane %v320, 0
      %v347 = vperm.slane %v321, 0
      %v348 = vperm.slane %v322, 0
      %vm353 = vcmask 261120
      %v355 = vsel %vm353, %v301, 0
      %357 = vmatpush.msra.mxu0 0.0
      %358 = vmatpush.msra.mxu0 0.0
      %359 = vmatpush.msra.mxu0 0.0
      %360 = vmatpush.msra.mxu0 0.0
      %361 = vmatpush.msra.mxu0 0.0
      %362 = vmatpush.msra.mxu0 0.0
      %363 = vmatpush.msra.mxu0 0.0
      %364 = vmatpush.msra.mxu0 0.0
      %365 = vmatpush.msra.mxu0 0.0
      %366 = vmatpush.msra.mxu0 0.0
      %367 = vmatpush.msra.mxu0 0.0
      %368 = vmatpush.msra.mxu0 0.0
      %369 = vmatpush.msra.mxu0 %v306
      %370 = vmatpush.msra.mxu0 %v305
      %371 = vmatpush.msra.mxu0 %v304
      %372 = vmatpush.msra.mxu0 %v303
      %373 = vmatmul.f32.gmra.mxu0 %v355
      %v374 = vpop.f32.mrf.mxu0
      %v375 = vadd.f32 %v345, %v374
      %376 = vdwg.mxu0
      %377 = vmatpush.msra.mxu0 0.0
      %378 = vmatpush.msra.mxu0 0.0
      %379 = vmatpush.msra.mxu0 0.0
      %380 = vmatpush.msra.mxu0 0.0
      %381 = vmatpush.msra.mxu0 0.0
      %382 = vmatpush.msra.mxu0 0.0
      %383 = vmatpush.msra.mxu0 0.0
      %384 = vmatpush.msra.mxu0 0.0
      %385 = vmatpush.msra.mxu0 0.0
      %386 = vmatpush.msra.mxu0 0.0
      %387 = vmatpush.msra.mxu0 0.0
      %388 = vmatpush.msra.mxu0 0.0
      %389 = vmatpush.msra.mxu0 %v310
      %390 = vmatpush.msra.mxu0 %v309
      %391 = vmatpush.msra.mxu0 %v308
      %392 = vmatpush.msra.mxu0 %v307
      %393 = vmatmul.f32.gmra.mxu0 %v355
      %v394 = vpop.f32.mrf.mxu0
      %v395 = vadd.f32 %v346, %v394
      %396 = vdwg.mxu0
      %397 = vmatpush.msra.mxu0 0.0
      %398 = vmatpush.msra.mxu0 0.0
      %399 = vmatpush.msra.mxu0 0.0
      %400 = vmatpush.msra.mxu0 0.0
      %401 = vmatpush.msra.mxu0 0.0
      %402 = vmatpush.msra.mxu0 0.0
      %403 = vmatpush.msra.mxu0 0.0
      %404 = vmatpush.msra.mxu0 0.0
      %405 = vmatpush.msra.mxu0 0.0
      %406 = vmatpush.msra.mxu0 0.0
      %407 = vmatpush.msra.mxu0 0.0
      %408 = vmatpush.msra.mxu0 0.0
      %409 = vmatpush.msra.mxu0 %v314
      %410 = vmatpush.msra.mxu0 %v313
      %411 = vmatpush.msra.mxu0 %v312
      %412 = vmatpush.msra.mxu0 %v311
      %413 = vmatmul.f32.gmra.mxu0 %v355
      %v414 = vpop.f32.mrf.mxu0
      %v415 = vadd.f32 %v347, %v414
      %416 = vdwg.mxu0
      %417 = vmatpush.msra.mxu0 0.0
      %418 = vmatpush.msra.mxu0 0.0
      %419 = vmatpush.msra.mxu0 0.0
      %420 = vmatpush.msra.mxu0 0.0
      %421 = vmatpush.msra.mxu0 0.0
      %422 = vmatpush.msra.mxu0 0.0
      %423 = vmatpush.msra.mxu0 0.0
      %424 = vmatpush.msra.mxu0 0.0
      %425 = vmatpush.msra.mxu0 0.0
      %426 = vmatpush.msra.mxu0 0.0
      %427 = vmatpush.msra.mxu0 0.0
      %428 = vmatpush.msra.mxu0 0.0
      %429 = vmatpush.msra.mxu0 %v318
      %430 = vmatpush.msra.mxu0 %v317
      %431 = vmatpush.msra.mxu0 %v316
      %432 = vmatpush.msra.mxu0 %v315
      %433 = vmatmul.f32.gmra.mxu0 %v355
      %v434 = vpop.f32.mrf.mxu0
      %v435 = vadd.f32 %v348, %v434
      %436 = vdwg.mxu0
      %438 = vrot.lane.b32.xlu0 %v375, 120
      %v439 = vpop.permute.xlu0 %438
      %vm440 = vcmask 64512
      %v441 = vsel %vm440, %v375, 0
      %v443 = vsel %vm440, %v439, 0
      %445 = vmatpush.xpose.msra.mxu0 0.0
      %446 = vmatpush.xpose.msra.mxu0 0.0
      %447 = vmatpush.xpose.msra.mxu0 0.0
      %448 = vmatpush.xpose.msra.mxu0 0.0
      %449 = vmatpush.xpose.msra.mxu0 0.0
      %450 = vmatpush.xpose.msra.mxu0 0.0
      %451 = vmatpush.xpose.msra.mxu0 0.0
      %452 = vmatpush.xpose.msra.mxu0 0.0
      %453 = vmatpush.xpose.msra.mxu0 0.0
      %454 = vmatpush.xpose.msra.mxu0 0.0
      %455 = vmatpush.xpose.msra.mxu0 0.0
      %456 = vmatpush.xpose.msra.mxu0 0.0
      %457 = vmatpush.xpose.msra.mxu0 0.0
      %458 = vmatpush.xpose.msra.mxu0 0.0
      %459 = vmatpush.xpose.msra.mxu0 0.0
      %460 = vmatpush.xpose.msra.mxu0 %v443
      %461 = vmatmul.f32.gmra.mxu0 %v441
      %v462 = vpop.f32.mrf.mxu0
      %v463 = vadd.f32 %v302, %v462
      %464 = vdwg.mxu0
      %466 = vrot.lane.b32.xlu0 %v395, 120
      %v467 = vpop.permute.xlu0 %466
      %v468 = vsel %vm440, %v395, 0
      %v470 = vsel %vm440, %v467, 0
      %472 = vmatpush.xpose.msra.mxu0 0.0
      %473 = vmatpush.xpose.msra.mxu0 0.0
      %474 = vmatpush.xpose.msra.mxu0 0.0
      %475 = vmatpush.xpose.msra.mxu0 0.0
      %476 = vmatpush.xpose.msra.mxu0 0.0
      %477 = vmatpush.xpose.msra.mxu0 0.0
      %478 = vmatpush.xpose.msra.mxu0 0.0
      %479 = vmatpush.xpose.msra.mxu0 0.0
      %480 = vmatpush.xpose.msra.mxu0 0.0
      %481 = vmatpush.xpose.msra.mxu0 0.0
      %482 = vmatpush.xpose.msra.mxu0 0.0
      %483 = vmatpush.xpose.msra.mxu0 0.0
      %484 = vmatpush.xpose.msra.mxu0 0.0
      %485 = vmatpush.xpose.msra.mxu0 0.0
      %486 = vmatpush.xpose.msra.mxu0 0.0
      %487 = vmatpush.xpose.msra.mxu0 %v470
      %488 = vmatmul.f32.gmra.mxu0 %v468
      %v489 = vpop.f32.mrf.mxu0
      %v490 = vadd.f32 %v302, %v489
      %491 = vdwg.mxu0
      %493 = vrot.lane.b32.xlu0 %v415, 120
      %v494 = vpop.permute.xlu0 %493
      %v495 = vsel %vm440, %v415, 0
      %v497 = vsel %vm440, %v494, 0
      %499 = vmatpush.xpose.msra.mxu0 0.0
      %500 = vmatpush.xpose.msra.mxu0 0.0
      %501 = vmatpush.xpose.msra.mxu0 0.0
      %502 = vmatpush.xpose.msra.mxu0 0.0
      %503 = vmatpush.xpose.msra.mxu0 0.0
      %504 = vmatpush.xpose.msra.mxu0 0.0
      %505 = vmatpush.xpose.msra.mxu0 0.0
      %506 = vmatpush.xpose.msra.mxu0 0.0
      %507 = vmatpush.xpose.msra.mxu0 0.0
      %508 = vmatpush.xpose.msra.mxu0 0.0
      %509 = vmatpush.xpose.msra.mxu0 0.0
      %510 = vmatpush.xpose.msra.mxu0 0.0
      %511 = vmatpush.xpose.msra.mxu0 0.0
      %512 = vmatpush.xpose.msra.mxu0 0.0
      %513 = vmatpush.xpose.msra.mxu0 0.0
      %514 = vmatpush.xpose.msra.mxu0 %v497
      %515 = vmatmul.f32.gmra.mxu0 %v495
      %v516 = vpop.f32.mrf.mxu0
      %v517 = vadd.f32 %v302, %v516
      %518 = vdwg.mxu0
      %520 = vrot.lane.b32.xlu0 %v435, 120
      %v521 = vpop.permute.xlu0 %520
      %v522 = vsel %vm440, %v435, 0
      %v524 = vsel %vm440, %v521, 0
      %526 = vmatpush.xpose.msra.mxu0 0.0
      %527 = vmatpush.xpose.msra.mxu0 0.0
      %528 = vmatpush.xpose.msra.mxu0 0.0
      %529 = vmatpush.xpose.msra.mxu0 0.0
      %530 = vmatpush.xpose.msra.mxu0 0.0
      %531 = vmatpush.xpose.msra.mxu0 0.0
      %532 = vmatpush.xpose.msra.mxu0 0.0
      %533 = vmatpush.xpose.msra.mxu0 0.0
      %534 = vmatpush.xpose.msra.mxu0 0.0
      %535 = vmatpush.xpose.msra.mxu0 0.0
      %536 = vmatpush.xpose.msra.mxu0 0.0
      %537 = vmatpush.xpose.msra.mxu0 0.0
      %538 = vmatpush.xpose.msra.mxu0 0.0
      %539 = vmatpush.xpose.msra.mxu0 0.0
      %540 = vmatpush.xpose.msra.mxu0 0.0
      %541 = vmatpush.xpose.msra.mxu0 %v524
      %542 = vmatmul.f32.gmra.mxu0 %v522
      %v543 = vpop.f32.mrf.mxu0
      %v544 = vadd.f32 %v302, %v543
      %545 = vdwg.mxu0
      %v546 = vsel %vm440, %v463, -inf
      %547 = vmax.xlane.f32.xlu0 %v546
      %v548 = vpop.xlane.xlu0 %547
      %v549 = vsel %vm440, %v490, -inf
      %550 = vmax.xlane.f32.xlu0 %v549
      %v551 = vpop.xlane.xlu0 %550
      %v552 = vsel %vm440, %v517, -inf
      %553 = vmax.xlane.f32.xlu0 %v552
      %v554 = vpop.xlane.xlu0 %553
      %v555 = vsel %vm440, %v544, -inf
      %556 = vmax.xlane.f32.xlu0 %v555
      %v557 = vpop.xlane.xlu0 %556
      %v558 = vsub.f32 %v463, %v548
      %v559 = vsub.f32 %v490, %v551
      %v560 = vsub.f32 %v517, %v554
      %v561 = vsub.f32 %v544, %v557
      %v562 = vmul.f32 %v558, 1.442695
      %v563 = vpow.pop %v562
      %v564 = vmul.f32 %v559, 1.442695
      %v565 = vpow.pop %v564
      %v566 = vmul.f32 %v560, 1.442695
      %v567 = vpow.pop %v566
      %v568 = vmul.f32 %v561, 1.442695
      %v569 = vpow.pop %v568
      %v570 = vsel %vm440, %v563, 0.0
      %571 = vadd.xlane.f32.xlu0 %v570
      %v572 = vpop.xlane.xlu0 %571
      %v573 = vsel %vm440, %v565, 0.0
      %574 = vadd.xlane.f32.xlu0 %v573
      %v575 = vpop.xlane.xlu0 %574
      %v576 = vsel %vm440, %v567, 0.0
      %577 = vadd.xlane.f32.xlu0 %v576
      %v578 = vpop.xlane.xlu0 %577
      %v579 = vsel %vm440, %v569, 0.0
      %580 = vadd.xlane.f32.xlu0 %v579
      %v581 = vpop.xlane.xlu0 %580
      %v582 = vrcp.pop %v572
      %v583 = vmul.f32 %v572, %v582
      %v584 = vsub.f32 1.0, %v583
      %v585 = vmul.f32 %v582, %v584
      %v586 = vadd.f32 %v582, %v585
      %vm587 = vweird.f32 %v572
      %vm588 = vweird.f32 %v582
      %vm589 = vmor %vm587, %vm588
      %v590 = vsel %vm589, %v582, %v586
      %v591 = vand.u32 2147483647, %v572
      %vm592 = vcmp.eq.f32.partialorder %v591, 8.507059e+37
      %v593 = vand.u32 %v572, 2147483648
      %v594 = vor.u32 1.1754944e-38, %v593
      %v595 = vsel %vm592, %v594, %v590
      %v596 = vmul.f32 1.0, %v595
      %v597 = vrcp.pop %v575
      %v598 = vmul.f32 %v575, %v597
      %v599 = vsub.f32 1.0, %v598
      %v600 = vmul.f32 %v597, %v599
      %v601 = vadd.f32 %v597, %v600
      %vm602 = vweird.f32 %v575
      %vm603 = vweird.f32 %v597
      %vm604 = vmor %vm602, %vm603
      %v605 = vsel %vm604, %v597, %v601
      %v606 = vand.u32 2147483647, %v575
      %vm607 = vcmp.eq.f32.partialorder %v606, 8.507059e+37
      %v608 = vand.u32 %v575, 2147483648
      %v609 = vor.u32 1.1754944e-38, %v608
      %v610 = vsel %vm607, %v609, %v605
      %v611 = vmul.f32 1.0, %v610
      %v612 = vrcp.pop %v578
      %v613 = vmul.f32 %v578, %v612
      %v614 = vsub.f32 1.0, %v613
      %v615 = vmul.f32 %v612, %v614
      %v616 = vadd.f32 %v612, %v615
      %vm617 = vweird.f32 %v578
      %vm618 = vweird.f32 %v612
      %vm619 = vmor %vm617, %vm618
      %v620 = vsel %vm619, %v612, %v616
      %v621 = vand.u32 2147483647, %v578
      %vm622 = vcmp.eq.f32.partialorder %v621, 8.507059e+37
      %v623 = vand.u32 %v578, 2147483648
      %v624 = vor.u32 1.1754944e-38, %v623
      %v625 = vsel %vm622, %v624, %v620
      %v626 = vmul.f32 1.0, %v625
      %v627 = vrcp.pop %v581
      %v628 = vmul.f32 %v581, %v627
      %v629 = vsub.f32 1.0, %v628
      %v630 = vmul.f32 %v627, %v629
      %v631 = vadd.f32 %v627, %v630
      %vm632 = vweird.f32 %v581
      %vm633 = vweird.f32 %v627
      %vm634 = vmor %vm632, %vm633
      %v635 = vsel %vm634, %v627, %v631
      %v636 = vand.u32 2147483647, %v581
      %vm637 = vcmp.eq.f32.partialorder %v636, 8.507059e+37
      %v638 = vand.u32 %v581, 2147483648
      %v639 = vor.u32 1.1754944e-38, %v638
      %v640 = vsel %vm637, %v639, %v635
      %v641 = vmul.f32 1.0, %v640
      %v642 = vmul.f32 %v563, %v596
      %v643 = vmul.f32 %v565, %v611
      %v644 = vmul.f32 %v567, %v626
      %v645 = vmul.f32 %v569, %v641
      %646 = vrot.lane.b32.xlu0 %v375, 112
      %v647 = vpop.permute.xlu0 %646
      %v650 = vsel %vm440, %v642, 0
      %652 = vmatpush.msra.mxu0 0.0
      %653 = vmatpush.msra.mxu0 0.0
      %654 = vmatpush.msra.mxu0 0.0
      %655 = vmatpush.msra.mxu0 0.0
      %656 = vmatpush.msra.mxu0 0.0
      %657 = vmatpush.msra.mxu0 0.0
      %658 = vmatpush.msra.mxu0 0.0
      %659 = vmatpush.msra.mxu0 0.0
      %660 = vmatpush.msra.mxu0 0.0
      %661 = vmatpush.msra.mxu0 0.0
      %662 = vmatpush.msra.mxu0 0.0
      %663 = vmatpush.msra.mxu0 0.0
      %664 = vmatpush.msra.mxu0 0.0
      %665 = vmatpush.msra.mxu0 0.0
      %666 = vmatpush.msra.mxu0 0.0
      %667 = vmatpush.msra.mxu0 %v647
      %668 = vmatmul.f32.gmra.mxu0 %v650
      %v669 = vpop.f32.mrf.mxu0
      %v670 = vadd.f32 0.0, %v669
      %671 = vdwg.mxu0
      %672 = vrot.lane.b32.xlu0 %v395, 112
      %v673 = vpop.permute.xlu0 %672
      %v676 = vsel %vm440, %v643, 0
      %678 = vmatpush.msra.mxu0 0.0
      %679 = vmatpush.msra.mxu0 0.0
      %680 = vmatpush.msra.mxu0 0.0
      %681 = vmatpush.msra.mxu0 0.0
      %682 = vmatpush.msra.mxu0 0.0
      %683 = vmatpush.msra.mxu0 0.0
      %684 = vmatpush.msra.mxu0 0.0
      %685 = vmatpush.msra.mxu0 0.0
      %686 = vmatpush.msra.mxu0 0.0
      %687 = vmatpush.msra.mxu0 0.0
      %688 = vmatpush.msra.mxu0 0.0
      %689 = vmatpush.msra.mxu0 0.0
      %690 = vmatpush.msra.mxu0 0.0
      %691 = vmatpush.msra.mxu0 0.0
      %692 = vmatpush.msra.mxu0 0.0
      %693 = vmatpush.msra.mxu0 %v673
      %694 = vmatmul.f32.gmra.mxu0 %v676
      %v695 = vpop.f32.mrf.mxu0
      %v696 = vadd.f32 0.0, %v695
      %697 = vdwg.mxu0
      %698 = vrot.lane.b32.xlu0 %v415, 112
      %v699 = vpop.permute.xlu0 %698
      %v702 = vsel %vm440, %v644, 0
      %704 = vmatpush.msra.mxu0 0.0
      %705 = vmatpush.msra.mxu0 0.0
      %706 = vmatpush.msra.mxu0 0.0
      %707 = vmatpush.msra.mxu0 0.0
      %708 = vmatpush.msra.mxu0 0.0
      %709 = vmatpush.msra.mxu0 0.0
      %710 = vmatpush.msra.mxu0 0.0
      %711 = vmatpush.msra.mxu0 0.0
      %712 = vmatpush.msra.mxu0 0.0
      %713 = vmatpush.msra.mxu0 0.0
      %714 = vmatpush.msra.mxu0 0.0
      %715 = vmatpush.msra.mxu0 0.0
      %716 = vmatpush.msra.mxu0 0.0
      %717 = vmatpush.msra.mxu0 0.0
      %718 = vmatpush.msra.mxu0 0.0
      %719 = vmatpush.msra.mxu0 %v699
      %720 = vmatmul.f32.gmra.mxu0 %v702
      %v721 = vpop.f32.mrf.mxu0
      %v722 = vadd.f32 0.0, %v721
      %723 = vdwg.mxu0
      %724 = vrot.lane.b32.xlu0 %v435, 112
      %v725 = vpop.permute.xlu0 %724
      %v728 = vsel %vm440, %v645, 0
      %730 = vmatpush.msra.mxu0 0.0
      %731 = vmatpush.msra.mxu0 0.0
      %732 = vmatpush.msra.mxu0 0.0
      %733 = vmatpush.msra.mxu0 0.0
      %734 = vmatpush.msra.mxu0 0.0
      %735 = vmatpush.msra.mxu0 0.0
      %736 = vmatpush.msra.mxu0 0.0
      %737 = vmatpush.msra.mxu0 0.0
      %738 = vmatpush.msra.mxu0 0.0
      %739 = vmatpush.msra.mxu0 0.0
      %740 = vmatpush.msra.mxu0 0.0
      %741 = vmatpush.msra.mxu0 0.0
      %742 = vmatpush.msra.mxu0 0.0
      %743 = vmatpush.msra.mxu0 0.0
      %744 = vmatpush.msra.mxu0 0.0
      %745 = vmatpush.msra.mxu0 %v725
      %746 = vmatmul.f32.gmra.mxu0 %v728
      %v747 = vpop.f32.mrf.mxu0
      %v748 = vadd.f32 0.0, %v747
      %749 = vdwg.mxu0
      %v751 = vsel %vm440, %v670, 0
      %753 = vmatpush.msra.mxu0 0.0
      %754 = vmatpush.msra.mxu0 0.0
      %755 = vmatpush.msra.mxu0 0.0
      %756 = vmatpush.msra.mxu0 0.0
      %757 = vmatpush.msra.mxu0 0.0
      %758 = vmatpush.msra.mxu0 0.0
      %759 = vmatpush.msra.mxu0 0.0
      %760 = vmatpush.msra.mxu0 0.0
      %761 = vmatpush.msra.mxu0 0.0
      %762 = vmatpush.msra.mxu0 0.0
      %763 = vmatpush.msra.mxu0 0.0
      %764 = vmatpush.msra.mxu0 0.0
      %765 = vmatpush.msra.mxu0 0.0
      %766 = vmatpush.msra.mxu0 0.0
      %767 = vmatpush.msra.mxu0 0.0
      %768 = vmatpush.msra.mxu0 %v323
      %769 = vmatmul.f32.gmra.mxu0 %v751
      %v770 = vpop.f32.mrf.mxu0
      %v771 = vadd.f32 0.0, %v770
      %772 = vdwg.mxu0
      %v774 = vsel %vm440, %v696, 0
      %776 = vmatpush.msra.mxu0 0.0
      %777 = vmatpush.msra.mxu0 0.0
      %778 = vmatpush.msra.mxu0 0.0
      %779 = vmatpush.msra.mxu0 0.0
      %780 = vmatpush.msra.mxu0 0.0
      %781 = vmatpush.msra.mxu0 0.0
      %782 = vmatpush.msra.mxu0 0.0
      %783 = vmatpush.msra.mxu0 0.0
      %784 = vmatpush.msra.mxu0 0.0
      %785 = vmatpush.msra.mxu0 0.0
      %786 = vmatpush.msra.mxu0 0.0
      %787 = vmatpush.msra.mxu0 0.0
      %788 = vmatpush.msra.mxu0 0.0
      %789 = vmatpush.msra.mxu0 0.0
      %790 = vmatpush.msra.mxu0 0.0
      %791 = vmatpush.msra.mxu0 %v324
      %792 = vmatmul.f32.gmra.mxu0 %v774
      %v793 = vpop.f32.mrf.mxu0
      %v794 = vadd.f32 0.0, %v793
      %795 = vdwg.mxu0
      %v797 = vsel %vm440, %v722, 0
      %799 = vmatpush.msra.mxu0 0.0
      %800 = vmatpush.msra.mxu0 0.0
      %801 = vmatpush.msra.mxu0 0.0
      %802 = vmatpush.msra.mxu0 0.0
      %803 = vmatpush.msra.mxu0 0.0
      %804 = vmatpush.msra.mxu0 0.0
      %805 = vmatpush.msra.mxu0 0.0
      %806 = vmatpush.msra.mxu0 0.0
      %807 = vmatpush.msra.mxu0 0.0
      %808 = vmatpush.msra.mxu0 0.0
      %809 = vmatpush.msra.mxu0 0.0
      %810 = vmatpush.msra.mxu0 0.0
      %811 = vmatpush.msra.mxu0 0.0
      %812 = vmatpush.msra.mxu0 0.0
      %813 = vmatpush.msra.mxu0 0.0
      %814 = vmatpush.msra.mxu0 %v325
      %815 = vmatmul.f32.gmra.mxu0 %v797
      %v816 = vpop.f32.mrf.mxu0
      %v817 = vadd.f32 0.0, %v816
      %818 = vdwg.mxu0
      %v820 = vsel %vm440, %v748, 0
      %822 = vmatpush.msra.mxu0 0.0
      %823 = vmatpush.msra.mxu0 0.0
      %824 = vmatpush.msra.mxu0 0.0
      %825 = vmatpush.msra.mxu0 0.0
      %826 = vmatpush.msra.mxu0 0.0
      %827 = vmatpush.msra.mxu0 0.0
      %828 = vmatpush.msra.mxu0 0.0
      %829 = vmatpush.msra.mxu0 0.0
      %830 = vmatpush.msra.mxu0 0.0
      %831 = vmatpush.msra.mxu0 0.0
      %832 = vmatpush.msra.mxu0 0.0
      %833 = vmatpush.msra.mxu0 0.0
      %834 = vmatpush.msra.mxu0 0.0
      %835 = vmatpush.msra.mxu0 0.0
      %836 = vmatpush.msra.mxu0 0.0
      %837 = vmatpush.msra.mxu0 %v326
      %838 = vmatmul.f32.gmra.mxu0 %v820
      %v839 = vpop.f32.mrf.mxu0
      %v840 = vadd.f32 0.0, %v839
      %841 = vdwg.mxu0
      %v842 = vsel %vm353, %v771, 0.0
      %v843 = vsel %vm353, %v794, 0.0
      %v844 = vadd.f32 %v842, %v843
      %v845 = vsel %vm353, %v817, 0.0
      %v846 = vadd.f32 %v844, %v845
      %v847 = vsel %vm353, %v840, 0.0
      %v848 = vadd.f32 %v846, %v847
      %v849 = vperm.slane %v339, 0
      %v850 = vadd.f32 %v848, %v849
      %v851 = vadd.f32 %v301, %v850
      %v852 = vsel %vm353, %v851, 0.0
      %853 = vadd.xlane.f32.xlu0 %v852
      %v854 = vpop.xlane.xlu0 %853
      %v855 = vrcp.pop 32.0
      %v856 = vmul.f32 32.0, %v855
      %v857 = vsub.f32 1.0, %v856
      %v858 = vmul.f32 %v855, %v857
      %v859 = vadd.f32 %v855, %v858
      %vm860 = vweird.f32 %v855
      %v861 = vsel %vm860, %v855, %v859
      %v862 = vmul.f32 %v854, %v861
      %v863 = vsub.f32 %v851, %v862
      %v864 = vmul.f32 %v863, %v863
      %v865 = vsel %vm353, %v864, 0.0
      %866 = vadd.xlane.f32.xlu0 %v865
      %v867 = vpop.xlane.xlu0 %866
      %v868 = vmul.f32 %v867, %v861
      %v869 = vadd.f32 %v868, 1e-05
      %v870 = vrsqrt.pop %v869
      %v871 = vmul.f32 %v870, %v869
      %v872 = vmul.f32 %v871, %v870
      %v873 = vmul.f32 0.5, %v872
      %v874 = vsub.f32 1.5, %v873
      %v875 = vmul.f32 %v870, %v874
      %vm876 = vweird.f32 %v869
      %vm877 = vweird.f32 %v870
      %vm878 = vmor %vm876, %vm877
      %v879 = vsel %vm878, %v870, %v875
      %v880 = vmul.f32 %v863, %v879
      %v881 = vperm.slane %v339, 3
      %v882 = vmul.f32 %v880, %v881
      %v883 = vperm.slane %v339, 4
      %v884 = vadd.f32 %v882, %v883
      %v885 = vperm.slane %v339, 1
      %v887 = vsel %vm353, %v884, 0
      %889 = vmatpush.msra.mxu0 0.0
      %890 = vmatpush.msra.mxu0 0.0
      %891 = vmatpush.msra.mxu0 0.0
      %892 = vmatpush.msra.mxu0 0.0
      %893 = vmatpush.msra.mxu0 0.0
      %894 = vmatpush.msra.mxu0 0.0
      %895 = vmatpush.msra.mxu0 0.0
      %896 = vmatpush.msra.mxu0 0.0
      %897 = vmatpush.msra.mxu0 0.0
      %898 = vmatpush.msra.mxu0 0.0
      %899 = vmatpush.msra.mxu0 0.0
      %900 = vmatpush.msra.mxu0 0.0
      %901 = vmatpush.msra.mxu0 %v330
      %902 = vmatpush.msra.mxu0 %v329
      %903 = vmatpush.msra.mxu0 %v328
      %904 = vmatpush.msra.mxu0 %v327
      %905 = vmatmul.f32.gmra.mxu0 %v887
      %v906 = vpop.f32.mrf.mxu0
      %v907 = vadd.f32 %v885, %v906
      %908 = vdwg.mxu0
      %v909 = vmax.f32 %v907, 0.0
      %v910 = vperm.slane %v339, 2
      %vm911 = vcmask 523264
      %v913 = vsel %vm911, %v909, 0
      %915 = vmatpush.msra.mxu0 0.0
      %916 = vmatpush.msra.mxu0 0.0
      %917 = vmatpush.msra.mxu0 0.0
      %918 = vmatpush.msra.mxu0 0.0
      %919 = vmatpush.msra.mxu0 0.0
      %920 = vmatpush.msra.mxu0 0.0
      %921 = vmatpush.msra.mxu0 0.0
      %922 = vmatpush.msra.mxu0 0.0
      %923 = vmatpush.msra.mxu0 %v338
      %924 = vmatpush.msra.mxu0 %v337
      %925 = vmatpush.msra.mxu0 %v336
      %926 = vmatpush.msra.mxu0 %v335
      %927 = vmatpush.msra.mxu0 %v334
      %928 = vmatpush.msra.mxu0 %v333
      %929 = vmatpush.msra.mxu0 %v332
      %930 = vmatpush.msra.mxu0 %v331
      %931 = vmatmul.f32.gmra.mxu0 %v913
      %v932 = vpop.f32.mrf.mxu0
      %v933 = vadd.f32 %v910, %v932
      %934 = vdwg.mxu0
      %v935 = vadd.f32 %v884, %v933
      %v936 = vsel %vm353, %v935, 0.0
      %937 = vadd.xlane.f32.xlu0 %v936
      %v938 = vpop.xlane.xlu0 %937
      %v939 = vmul.f32 %v938, %v861
      %v940 = vsub.f32 %v935, %v939
      %v941 = vmul.f32 %v940, %v940
      %v942 = vsel %vm353, %v941, 0.0
      %943 = vadd.xlane.f32.xlu0 %v942
      %v944 = vpop.xlane.xlu0 %943
      %v945 = vmul.f32 %v944, %v861
      %v946 = vadd.f32 %v945, 1e-05
      %v947 = vrsqrt.pop %v946
      %v948 = vmul.f32 %v947, %v946
      %v949 = vmul.f32 %v948, %v947
      %v950 = vmul.f32 0.5, %v949
      %v951 = vsub.f32 1.5, %v950
      %v952 = vmul.f32 %v947, %v951
      %vm953 = vweird.f32 %v946
      %vm954 = vweird.f32 %v947
      %vm955 = vmor %vm953, %vm954
      %v956 = vsel %vm955, %v947, %v952
      %v957 = vmul.f32 %v940, %v956
      %v958 = vperm.slane %v339, 5
      %v959 = vmul.f32 %v957, %v958
      %v960 = vperm.slane %v339, 6
      %v961 = vadd.f32 %v959, %v960
      %v963 = vsel %vm353, %v961, 0
      %965 = vmatpush.msra.mxu0 0.0
      %966 = vmatpush.msra.mxu0 0.0
      %967 = vmatpush.msra.mxu0 0.0
      %968 = vmatpush.msra.mxu0 0.0
      %969 = vmatpush.msra.mxu0 0.0
      %970 = vmatpush.msra.mxu0 0.0
      %971 = vmatpush.msra.mxu0 0.0
      %972 = vmatpush.msra.mxu0 0.0
      %973 = vmatpush.msra.mxu0 0.0
      %974 = vmatpush.msra.mxu0 0.0
      %975 = vmatpush.msra.mxu0 0.0
      %976 = vmatpush.msra.mxu0 0.0
      %977 = vmatpush.msra.mxu0 %v306
      %978 = vmatpush.msra.mxu0 %v305
      %979 = vmatpush.msra.mxu0 %v304
      %980 = vmatpush.msra.mxu0 %v303
      %981 = vmatmul.f32.gmra.mxu0 %v963
      %v982 = vpop.f32.mrf.mxu0
      %v983 = vadd.f32 %v345, %v982
      %984 = vdwg.mxu0
      %985 = vmatpush.msra.mxu0 0.0
      %986 = vmatpush.msra.mxu0 0.0
      %987 = vmatpush.msra.mxu0 0.0
      %988 = vmatpush.msra.mxu0 0.0
      %989 = vmatpush.msra.mxu0 0.0
      %990 = vmatpush.msra.mxu0 0.0
      %991 = vmatpush.msra.mxu0 0.0
      %992 = vmatpush.msra.mxu0 0.0
      %993 = vmatpush.msra.mxu0 0.0
      %994 = vmatpush.msra.mxu0 0.0
      %995 = vmatpush.msra.mxu0 0.0
      %996 = vmatpush.msra.mxu0 0.0
      %997 = vmatpush.msra.mxu0 %v310
      %998 = vmatpush.msra.mxu0 %v309
      %999 = vmatpush.msra.mxu0 %v308
      %1000 = vmatpush.msra.mxu0 %v307
      %1001 = vmatmul.f32.gmra.mxu0 %v963
      %v1002 = vpop.f32.mrf.mxu0
      %v1003 = vadd.f32 %v346, %v1002
      %1004 = vdwg.mxu0
      %1005 = vmatpush.msra.mxu0 0.0
      %1006 = vmatpush.msra.mxu0 0.0
      %1007 = vmatpush.msra.mxu0 0.0
      %1008 = vmatpush.msra.mxu0 0.0
      %1009 = vmatpush.msra.mxu0 0.0
      %1010 = vmatpush.msra.mxu0 0.0
      %1011 = vmatpush.msra.mxu0 0.0
      %1012 = vmatpush.msra.mxu0 0.0
      %1013 = vmatpush.msra.mxu0 0.0
      %1014 = vmatpush.msra.mxu0 0.0
      %1015 = vmatpush.msra.mxu0 0.0
      %1016 = vmatpush.msra.mxu0 0.0
      %1017 = vmatpush.msra.mxu0 %v314
      %1018 = vmatpush.msra.mxu0 %v313
      %1019 = vmatpush.msra.mxu0 %v312
      %1020 = vmatpush.msra.mxu0 %v311
      %1021 = vmatmul.f32.gmra.mxu0 %v963
      %v1022 = vpop.f32.mrf.mxu0
      %v1023 = vadd.f32 %v347, %v1022
      %1024 = vdwg.mxu0
      %1025 = vmatpush.msra.mxu0 0.0
      %1026 = vmatpush.msra.mxu0 0.0
      %1027 = vmatpush.msra.mxu0 0.0
      %1028 = vmatpush.msra.mxu0 0.0
      %1029 = vmatpush.msra.mxu0 0.0
      %1030 = vmatpush.msra.mxu0 0.0
      %1031 = vmatpush.msra.mxu0 0.0
      %1032 = vmatpush.msra.mxu0 0.0
      %1033 = vmatpush.msra.mxu0 0.0
      %1034 = vmatpush.msra.mxu0 0.0
      %1035 = vmatpush.msra.mxu0 0.0
      %1036 = vmatpush.msra.mxu0 0.0
      %1037 = vmatpush.msra.mxu0 %v318
      %1038 = vmatpush.msra.mxu0 %v317
      %1039 = vmatpush.msra.mxu0 %v316
      %1040 = vmatpush.msra.mxu0 %v315
      %1041 = vmatmul.f32.gmra.mxu0 %v963
      %v1042 = vpop.f32.mrf.mxu0
      %v1043 = vadd.f32 %v348, %v1042
      %1044 = vdwg.mxu0
      %1046 = vrot.lane.b32.xlu0 %v983, 120
      %v1047 = vpop.permute.xlu0 %1046
      %v1048 = vsel %vm440, %v983, 0
      %v1050 = vsel %vm440, %v1047, 0
      %1052 = vmatpush.xpose.msra.mxu0 0.0
      %1053 = vmatpush.xpose.msra.mxu0 0.0
      %1054 = vmatpush.xpose.msra.mxu0 0.0
      %1055 = vmatpush.xpose.msra.mxu0 0.0
      %1056 = vmatpush.xpose.msra.mxu0 0.0
      %1057 = vmatpush.xpose.msra.mxu0 0.0
      %1058 = vmatpush.xpose.msra.mxu0 0.0
      %1059 = vmatpush.xpose.msra.mxu0 0.0
      %1060 = vmatpush.xpose.msra.mxu0 0.0
      %1061 = vmatpush.xpose.msra.mxu0 0.0
      %1062 = vmatpush.xpose.msra.mxu0 0.0
      %1063 = vmatpush.xpose.msra.mxu0 0.0
      %1064 = vmatpush.xpose.msra.mxu0 0.0
      %1065 = vmatpush.xpose.msra.mxu0 0.0
      %1066 = vmatpush.xpose.msra.mxu0 0.0
      %1067 = vmatpush.xpose.msra.mxu0 %v1050
      %1068 = vmatmul.f32.gmra.mxu0 %v1048
      %v1069 = vpop.f32.mrf.mxu0
      %v1070 = vadd.f32 %v302, %v1069
      %1071 = vdwg.mxu0
      %1073 = vrot.lane.b32.xlu0 %v1003, 120
      %v1074 = vpop.permute.xlu0 %1073
      %v1075 = vsel %vm440, %v1003, 0
      %v1077 = vsel %vm440, %v1074, 0
      %1079 = vmatpush.xpose.msra.mxu0 0.0
      %1080 = vmatpush.xpose.msra.mxu0 0.0
      %1081 = vmatpush.xpose.msra.mxu0 0.0
      %1082 = vmatpush.xpose.msra.mxu0 0.0
      %1083 = vmatpush.xpose.msra.mxu0 0.0
      %1084 = vmatpush.xpose.msra.mxu0 0.0
      %1085 = vmatpush.xpose.msra.mxu0 0.0
      %1086 = vmatpush.xpose.msra.mxu0 0.0
      %1087 = vmatpush.xpose.msra.mxu0 0.0
      %1088 = vmatpush.xpose.msra.mxu0 0.0
      %1089 = vmatpush.xpose.msra.mxu0 0.0
      %1090 = vmatpush.xpose.msra.mxu0 0.0
      %1091 = vmatpush.xpose.msra.mxu0 0.0
      %1092 = vmatpush.xpose.msra.mxu0 0.0
      %1093 = vmatpush.xpose.msra.mxu0 0.0
      %1094 = vmatpush.xpose.msra.mxu0 %v1077
      %1095 = vmatmul.f32.gmra.mxu0 %v1075
      %v1096 = vpop.f32.mrf.mxu0
      %v1097 = vadd.f32 %v302, %v1096
      %1098 = vdwg.mxu0
      %1100 = vrot.lane.b32.xlu0 %v1023, 120
      %v1101 = vpop.permute.xlu0 %1100
      %v1102 = vsel %vm440, %v1023, 0
      %v1104 = vsel %vm440, %v1101, 0
      %1106 = vmatpush.xpose.msra.mxu0 0.0
      %1107 = vmatpush.xpose.msra.mxu0 0.0
      %1108 = vmatpush.xpose.msra.mxu0 0.0
      %1109 = vmatpush.xpose.msra.mxu0 0.0
      %1110 = vmatpush.xpose.msra.mxu0 0.0
      %1111 = vmatpush.xpose.msra.mxu0 0.0
      %1112 = vmatpush.xpose.msra.mxu0 0.0
      %1113 = vmatpush.xpose.msra.mxu0 0.0
      %1114 = vmatpush.xpose.msra.mxu0 0.0
      %1115 = vmatpush.xpose.msra.mxu0 0.0
      %1116 = vmatpush.xpose.msra.mxu0 0.0
      %1117 = vmatpush.xpose.msra.mxu0 0.0
      %1118 = vmatpush.xpose.msra.mxu0 0.0
      %1119 = vmatpush.xpose.msra.mxu0 0.0
      %1120 = vmatpush.xpose.msra.mxu0 0.0
      %1121 = vmatpush.xpose.msra.mxu0 %v1104
      %1122 = vmatmul.f32.gmra.mxu0 %v1102
      %v1123 = vpop.f32.mrf.mxu0
      %v1124 = vadd.f32 %v302, %v1123
      %1125 = vdwg.mxu0
      %1127 = vrot.lane.b32.xlu0 %v1043, 120
      %v1128 = vpop.permute.xlu0 %1127
      %v1129 = vsel %vm440, %v1043, 0
      %v1131 = vsel %vm440, %v1128, 0
      %1133 = vmatpush.xpose.msra.mxu0 0.0
      %1134 = vmatpush.xpose.msra.mxu0 0.0
      %1135 = vmatpush.xpose.msra.mxu0 0.0
      %1136 = vmatpush.xpose.msra.mxu0 0.0
      %1137 = vmatpush.xpose.msra.mxu0 0.0
      %1138 = vmatpush.xpose.msra.mxu0 0.0
      %1139 = vmatpush.xpose.msra.mxu0 0.0
      %1140 = vmatpush.xpose.msra.mxu0 0.0
      %1141 = vmatpush.xpose.msra.mxu0 0.0
      %1142 = vmatpush.xpose.msra.mxu0 0.0
      %1143 = vmatpush.xpose.msra.mxu0 0.0
      %1144 = vmatpush.xpose.msra.mxu0 0.0
      %1145 = vmatpush.xpose.msra.mxu0 0.0
      %1146 = vmatpush.xpose.msra.mxu0 0.0
      %1147 = vmatpush.xpose.msra.mxu0 0.0
      %1148 = vmatpush.xpose.msra.mxu0 %v1131
      %1149 = vmatmul.f32.gmra.mxu0 %v1129
      %v1150 = vpop.f32.mrf.mxu0
      %v1151 = vadd.f32 %v302, %v1150
      %1152 = vdwg.mxu0
      %v1153 = vsel %vm440, %v1070, -inf
      %1154 = vmax.xlane.f32.xlu0 %v1153
      %v1155 = vpop.xlane.xlu0 %1154
      %v1156 = vsel %vm440, %v1097, -inf
      %1157 = vmax.xlane.f32.xlu0 %v1156
      %v1158 = vpop.xlane.xlu0 %1157
      %v1159 = vsel %vm440, %v1124, -inf
      %1160 = vmax.xlane.f32.xlu0 %v1159
      %v1161 = vpop.xlane.xlu0 %1160
      %v1162 = vsel %vm440, %v1151, -inf
      %1163 = vmax.xlane.f32.xlu0 %v1162
      %v1164 = vpop.xlane.xlu0 %1163
      %v1165 = vsub.f32 %v1070, %v1155
      %v1166 = vsub.f32 %v1097, %v1158
      %v1167 = vsub.f32 %v1124, %v1161
      %v1168 = vsub.f32 %v1151, %v1164
      %v1169 = vmul.f32 %v1165, 1.442695
      %v1170 = vpow.pop %v1169
      %v1171 = vmul.f32 %v1166, 1.442695
      %v1172 = vpow.pop %v1171
      %v1173 = vmul.f32 %v1167, 1.442695
      %v1174 = vpow.pop %v1173
      %v1175 = vmul.f32 %v1168, 1.442695
      %v1176 = vpow.pop %v1175
      %v1177 = vsel %vm440, %v1170, 0.0
      %1178 = vadd.xlane.f32.xlu0 %v1177
      %v1179 = vpop.xlane.xlu0 %1178
      %v1180 = vsel %vm440, %v1172, 0.0
      %1181 = vadd.xlane.f32.xlu0 %v1180
      %v1182 = vpop.xlane.xlu0 %1181
      %v1183 = vsel %vm440, %v1174, 0.0
      %1184 = vadd.xlane.f32.xlu0 %v1183
      %v1185 = vpop.xlane.xlu0 %1184
      %v1186 = vsel %vm440, %v1176, 0.0
      %1187 = vadd.xlane.f32.xlu0 %v1186
      %v1188 = vpop.xlane.xlu0 %1187
      %v1189 = vrcp.pop %v1179
      %v1190 = vmul.f32 %v1179, %v1189
      %v1191 = vsub.f32 1.0, %v1190
      %v1192 = vmul.f32 %v1189, %v1191
      %v1193 = vadd.f32 %v1189, %v1192
      %vm1194 = vweird.f32 %v1179
      %vm1195 = vweird.f32 %v1189
      %vm1196 = vmor %vm1194, %vm1195
      %v1197 = vsel %vm1196, %v1189, %v1193
      %v1198 = vand.u32 2147483647, %v1179
      %vm1199 = vcmp.eq.f32.partialorder %v1198, 8.507059e+37
      %v1200 = vand.u32 %v1179, 2147483648
      %v1201 = vor.u32 1.1754944e-38, %v1200
      %v1202 = vsel %vm1199, %v1201, %v1197
      %v1203 = vmul.f32 1.0, %v1202
      %v1204 = vrcp.pop %v1182
      %v1205 = vmul.f32 %v1182, %v1204
      %v1206 = vsub.f32 1.0, %v1205
      %v1207 = vmul.f32 %v1204, %v1206
      %v1208 = vadd.f32 %v1204, %v1207
      %vm1209 = vweird.f32 %v1182
      %vm1210 = vweird.f32 %v1204
      %vm1211 = vmor %vm1209, %vm1210
      %v1212 = vsel %vm1211, %v1204, %v1208
      %v1213 = vand.u32 2147483647, %v1182
      %vm1214 = vcmp.eq.f32.partialorder %v1213, 8.507059e+37
      %v1215 = vand.u32 %v1182, 2147483648
      %v1216 = vor.u32 1.1754944e-38, %v1215
      %v1217 = vsel %vm1214, %v1216, %v1212
      %v1218 = vmul.f32 1.0, %v1217
      %v1219 = vrcp.pop %v1185
      %v1220 = vmul.f32 %v1185, %v1219
      %v1221 = vsub.f32 1.0, %v1220
      %v1222 = vmul.f32 %v1219, %v1221
      %v1223 = vadd.f32 %v1219, %v1222
      %vm1224 = vweird.f32 %v1185
      %vm1225 = vweird.f32 %v1219
      %vm1226 = vmor %vm1224, %vm1225
      %v1227 = vsel %vm1226, %v1219, %v1223
      %v1228 = vand.u32 2147483647, %v1185
      %vm1229 = vcmp.eq.f32.partialorder %v1228, 8.507059e+37
      %v1230 = vand.u32 %v1185, 2147483648
      %v1231 = vor.u32 1.1754944e-38, %v1230
      %v1232 = vsel %vm1229, %v1231, %v1227
      %v1233 = vmul.f32 1.0, %v1232
      %v1234 = vrcp.pop %v1188
      %v1235 = vmul.f32 %v1188, %v1234
      %v1236 = vsub.f32 1.0, %v1235
      %v1237 = vmul.f32 %v1234, %v1236
      %v1238 = vadd.f32 %v1234, %v1237
      %vm1239 = vweird.f32 %v1188
      %vm1240 = vweird.f32 %v1234
      %vm1241 = vmor %vm1239, %vm1240
      %v1242 = vsel %vm1241, %v1234, %v1238
      %v1243 = vand.u32 2147483647, %v1188
      %vm1244 = vcmp.eq.f32.partialorder %v1243, 8.507059e+37
      %v1245 = vand.u32 %v1188, 2147483648
      %v1246 = vor.u32 1.1754944e-38, %v1245
      %v1247 = vsel %vm1244, %v1246, %v1242
      %v1248 = vmul.f32 1.0, %v1247
      %v1249 = vmul.f32 %v1170, %v1203
      %v1250 = vmul.f32 %v1172, %v1218
      %v1251 = vmul.f32 %v1174, %v1233
      %v1252 = vmul.f32 %v1176, %v1248
      %1253 = vrot.lane.b32.xlu0 %v983, 112
      %v1254 = vpop.permute.xlu0 %1253
      %v1257 = vsel %vm440, %v1249, 0
      %1259 = vmatpush.msra.mxu0 0.0
      %1260 = vmatpush.msra.mxu0 0.0
      %1261 = vmatpush.msra.mxu0 0.0
      %1262 = vmatpush.msra.mxu0 0.0
      %1263 = vmatpush.msra.mxu0 0.0
      %1264 = vmatpush.msra.mxu0 0.0
      %1265 = vmatpush.msra.mxu0 0.0
      %1266 = vmatpush.msra.mxu0 0.0
      %1267 = vmatpush.msra.mxu0 0.0
      %1268 = vmatpush.msra.mxu0 0.0
      %1269 = vmatpush.msra.mxu0 0.0
      %1270 = vmatpush.msra.mxu0 0.0
      %1271 = vmatpush.msra.mxu0 0.0
      %1272 = vmatpush.msra.mxu0 0.0
      %1273 = vmatpush.msra.mxu0 0.0
      %1274 = vmatpush.msra.mxu0 %v1254
      %1275 = vmatmul.f32.gmra.mxu0 %v1257
      %v1276 = vpop.f32.mrf.mxu0
      %v1277 = vadd.f32 0.0, %v1276
      %1278 = vdwg.mxu0
      %1279 = vrot.lane.b32.xlu0 %v1003, 112
      %v1280 = vpop.permute.xlu0 %1279
      %v1283 = vsel %vm440, %v1250, 0
      %1285 = vmatpush.msra.mxu0 0.0
      %1286 = vmatpush.msra.mxu0 0.0
      %1287 = vmatpush.msra.mxu0 0.0
      %1288 = vmatpush.msra.mxu0 0.0
      %1289 = vmatpush.msra.mxu0 0.0
      %1290 = vmatpush.msra.mxu0 0.0
      %1291 = vmatpush.msra.mxu0 0.0
      %1292 = vmatpush.msra.mxu0 0.0
      %1293 = vmatpush.msra.mxu0 0.0
      %1294 = vmatpush.msra.mxu0 0.0
      %1295 = vmatpush.msra.mxu0 0.0
      %1296 = vmatpush.msra.mxu0 0.0
      %1297 = vmatpush.msra.mxu0 0.0
      %1298 = vmatpush.msra.mxu0 0.0
      %1299 = vmatpush.msra.mxu0 0.0
      %1300 = vmatpush.msra.mxu0 %v1280
      %1301 = vmatmul.f32.gmra.mxu0 %v1283
      %v1302 = vpop.f32.mrf.mxu0
      %v1303 = vadd.f32 0.0, %v1302
      %1304 = vdwg.mxu0
      %1305 = vrot.lane.b32.xlu0 %v1023, 112
      %v1306 = vpop.permute.xlu0 %1305
      %v1309 = vsel %vm440, %v1251, 0
      %1311 = vmatpush.msra.mxu0 0.0
      %1312 = vmatpush.msra.mxu0 0.0
      %1313 = vmatpush.msra.mxu0 0.0
      %1314 = vmatpush.msra.mxu0 0.0
      %1315 = vmatpush.msra.mxu0 0.0
      %1316 = vmatpush.msra.mxu0 0.0
      %1317 = vmatpush.msra.mxu0 0.0
      %1318 = vmatpush.msra.mxu0 0.0
      %1319 = vmatpush.msra.mxu0 0.0
      %1320 = vmatpush.msra.mxu0 0.0
      %1321 = vmatpush.msra.mxu0 0.0
      %1322 = vmatpush.msra.mxu0 0.0
      %1323 = vmatpush.msra.mxu0 0.0
      %1324 = vmatpush.msra.mxu0 0.0
      %1325 = vmatpush.msra.mxu0 0.0
      %1326 = vmatpush.msra.mxu0 %v1306
      %1327 = vmatmul.f32.gmra.mxu0 %v1309
      %v1328 = vpop.f32.mrf.mxu0
      %v1329 = vadd.f32 0.0, %v1328
      %1330 = vdwg.mxu0
      %1331 = vrot.lane.b32.xlu0 %v1043, 112
      %v1332 = vpop.permute.xlu0 %1331
      %v1335 = vsel %vm440, %v1252, 0
      %1337 = vmatpush.msra.mxu0 0.0
      %1338 = vmatpush.msra.mxu0 0.0
      %1339 = vmatpush.msra.mxu0 0.0
      %1340 = vmatpush.msra.mxu0 0.0
      %1341 = vmatpush.msra.mxu0 0.0
      %1342 = vmatpush.msra.mxu0 0.0
      %1343 = vmatpush.msra.mxu0 0.0
      %1344 = vmatpush.msra.mxu0 0.0
      %1345 = vmatpush.msra.mxu0 0.0
      %1346 = vmatpush.msra.mxu0 0.0
      %1347 = vmatpush.msra.mxu0 0.0
      %1348 = vmatpush.msra.mxu0 0.0
      %1349 = vmatpush.msra.mxu0 0.0
      %1350 = vmatpush.msra.mxu0 0.0
      %1351 = vmatpush.msra.mxu0 0.0
      %1352 = vmatpush.msra.mxu0 %v1332
      %1353 = vmatmul.f32.gmra.mxu0 %v1335
      %v1354 = vpop.f32.mrf.mxu0
      %v1355 = vadd.f32 0.0, %v1354
      %1356 = vdwg.mxu0
      %v1358 = vsel %vm440, %v1277, 0
      %1360 = vmatpush.msra.mxu0 0.0
      %1361 = vmatpush.msra.mxu0 0.0
      %1362 = vmatpush.msra.mxu0 0.0
      %1363 = vmatpush.msra.mxu0 0.0
      %1364 = vmatpush.msra.mxu0 0.0
      %1365 = vmatpush.msra.mxu0 0.0
      %1366 = vmatpush.msra.mxu0 0.0
      %1367 = vmatpush.msra.mxu0 0.0
      %1368 = vmatpush.msra.mxu0 0.0
      %1369 = vmatpush.msra.mxu0 0.0
      %1370 = vmatpush.msra.mxu0 0.0
      %1371 = vmatpush.msra.mxu0 0.0
      %1372 = vmatpush.msra.mxu0 0.0
      %1373 = vmatpush.msra.mxu0 0.0
      %1374 = vmatpush.msra.mxu0 0.0
      %1375 = vmatpush.msra.mxu0 %v323
      %1376 = vmatmul.f32.gmra.mxu0 %v1358
      %v1377 = vpop.f32.mrf.mxu0
      %v1378 = vadd.f32 0.0, %v1377
      %1379 = vdwg.mxu0
      %v1381 = vsel %vm440, %v1303, 0
      %1383 = vmatpush.msra.mxu0 0.0
      %1384 = vmatpush.msra.mxu0 0.0
      %1385 = vmatpush.msra.mxu0 0.0
      %1386 = vmatpush.msra.mxu0 0.0
      %1387 = vmatpush.msra.mxu0 0.0
      %1388 = vmatpush.msra.mxu0 0.0
      %1389 = vmatpush.msra.mxu0 0.0
      %1390 = vmatpush.msra.mxu0 0.0
      %1391 = vmatpush.msra.mxu0 0.0
      %1392 = vmatpush.msra.mxu0 0.0
      %1393 = vmatpush.msra.mxu0 0.0
      %1394 = vmatpush.msra.mxu0 0.0
      %1395 = vmatpush.msra.mxu0 0.0
      %1396 = vmatpush.msra.mxu0 0.0
      %1397 = vmatpush.msra.mxu0 0.0
      %1398 = vmatpush.msra.mxu0 %v324
      %1399 = vmatmul.f32.gmra.mxu0 %v1381
      %v1400 = vpop.f32.mrf.mxu0
      %v1401 = vadd.f32 0.0, %v1400
      %1402 = vdwg.mxu0
      %v1404 = vsel %vm440, %v1329, 0
      %1406 = vmatpush.msra.mxu0 0.0
      %1407 = vmatpush.msra.mxu0 0.0
      %1408 = vmatpush.msra.mxu0 0.0
      %1409 = vmatpush.msra.mxu0 0.0
      %1410 = vmatpush.msra.mxu0 0.0
      %1411 = vmatpush.msra.mxu0 0.0
      %1412 = vmatpush.msra.mxu0 0.0
      %1413 = vmatpush.msra.mxu0 0.0
      %1414 = vmatpush.msra.mxu0 0.0
      %1415 = vmatpush.msra.mxu0 0.0
      %1416 = vmatpush.msra.mxu0 0.0
      %1417 = vmatpush.msra.mxu0 0.0
      %1418 = vmatpush.msra.mxu0 0.0
      %1419 = vmatpush.msra.mxu0 0.0
      %1420 = vmatpush.msra.mxu0 0.0
      %1421 = vmatpush.msra.mxu0 %v325
      %1422 = vmatmul.f32.gmra.mxu0 %v1404
      %v1423 = vpop.f32.mrf.mxu0
      %v1424 = vadd.f32 0.0, %v1423
      %1425 = vdwg.mxu0
      %v1427 = vsel %vm440, %v1355, 0
      %1429 = vmatpush.msra.mxu0 0.0
      %1430 = vmatpush.msra.mxu0 0.0
      %1431 = vmatpush.msra.mxu0 0.0
      %1432 = vmatpush.msra.mxu0 0.0
      %1433 = vmatpush.msra.mxu0 0.0
      %1434 = vmatpush.msra.mxu0 0.0
      %1435 = vmatpush.msra.mxu0 0.0
      %1436 = vmatpush.msra.mxu0 0.0
      %1437 = vmatpush.msra.mxu0 0.0
      %1438 = vmatpush.msra.mxu0 0.0
      %1439 = vmatpush.msra.mxu0 0.0
      %1440 = vmatpush.msra.mxu0 0.0
      %1441 = vmatpush.msra.mxu0 0.0
      %1442 = vmatpush.msra.mxu0 0.0
      %1443 = vmatpush.msra.mxu0 0.0
      %1444 = vmatpush.msra.mxu0 %v326
      %1445 = vmatmul.f32.gmra.mxu0 %v1427
      %v1446 = vpop.f32.mrf.mxu0
      %v1447 = vadd.f32 0.0, %v1446
      %1448 = vdwg.mxu0
      %v1449 = vsel %vm353, %v1378, 0.0
      %v1450 = vsel %vm353, %v1401, 0.0
      %v1451 = vadd.f32 %v1449, %v1450
      %v1452 = vsel %vm353, %v1424, 0.0
      %v1453 = vadd.f32 %v1451, %v1452
      %v1454 = vsel %vm353, %v1447, 0.0
      %v1455 = vadd.f32 %v1453, %v1454
      %v1456 = vadd.f32 %v1455, %v849
      %v1457 = vadd.f32 %v961, %v1456
      %v1458 = vsel %vm353, %v1457, 0.0
      %1459 = vadd.xlane.f32.xlu0 %v1458
      %v1460 = vpop.xlane.xlu0 %1459
      %v1461 = vmul.f32 %v1460, %v861
      %v1462 = vsub.f32 %v1457, %v1461
      %v1463 = vmul.f32 %v1462, %v1462
      %v1464 = vsel %vm353, %v1463, 0.0
      %1465 = vadd.xlane.f32.xlu0 %v1464
      %v1466 = vpop.xlane.xlu0 %1465
      %v1467 = vmul.f32 %v1466, %v861
      %v1468 = vadd.f32 %v1467, 1e-05
      %v1469 = vrsqrt.pop %v1468
      %v1470 = vmul.f32 %v1469, %v1468
      %v1471 = vmul.f32 %v1470, %v1469
      %v1472 = vmul.f32 0.5, %v1471
      %v1473 = vsub.f32 1.5, %v1472
      %v1474 = vmul.f32 %v1469, %v1473
      %vm1475 = vweird.f32 %v1468
      %vm1476 = vweird.f32 %v1469
      %vm1477 = vmor %vm1475, %vm1476
      %v1478 = vsel %vm1477, %v1469, %v1474
      %v1479 = vmul.f32 %v1462, %v1478
      %v1480 = vmul.f32 %v1479, %v881
      %v1481 = vadd.f32 %v1480, %v883
      %v1483 = vsel %vm353, %v1481, 0
      %1485 = vmatpush.msra.mxu0 0.0
      %1486 = vmatpush.msra.mxu0 0.0
      %1487 = vmatpush.msra.mxu0 0.0
      %1488 = vmatpush.msra.mxu0 0.0
      %1489 = vmatpush.msra.mxu0 0.0
      %1490 = vmatpush.msra.mxu0 0.0
      %1491 = vmatpush.msra.mxu0 0.0
      %1492 = vmatpush.msra.mxu0 0.0
      %1493 = vmatpush.msra.mxu0 0.0
      %1494 = vmatpush.msra.mxu0 0.0
      %1495 = vmatpush.msra.mxu0 0.0
      %1496 = vmatpush.msra.mxu0 0.0
      %1497 = vmatpush.msra.mxu0 %v330
      %1498 = vmatpush.msra.mxu0 %v329
      %1499 = vmatpush.msra.mxu0 %v328
      %1500 = vmatpush.msra.mxu0 %v327
      %1501 = vmatmul.f32.gmra.mxu0 %v1483
      %v1502 = vpop.f32.mrf.mxu0
      %v1503 = vadd.f32 %v885, %v1502
      %1504 = vdwg.mxu0
      %v1505 = vmax.f32 %v1503, 0.0
      %v1507 = vsel %vm911, %v1505, 0
      %1509 = vmatpush.msra.mxu0 0.0
      %1510 = vmatpush.msra.mxu0 0.0
      %1511 = vmatpush.msra.mxu0 0.0
      %1512 = vmatpush.msra.mxu0 0.0
      %1513 = vmatpush.msra.mxu0 0.0
      %1514 = vmatpush.msra.mxu0 0.0
      %1515 = vmatpush.msra.mxu0 0.0
      %1516 = vmatpush.msra.mxu0 0.0
      %1517 = vmatpush.msra.mxu0 %v338
      %1518 = vmatpush.msra.mxu0 %v337
      %1519 = vmatpush.msra.mxu0 %v336
      %1520 = vmatpush.msra.mxu0 %v335
      %1521 = vmatpush.msra.mxu0 %v334
      %1522 = vmatpush.msra.mxu0 %v333
      %1523 = vmatpush.msra.mxu0 %v332
      %1524 = vmatpush.msra.mxu0 %v331
      %1525 = vmatmul.f32.gmra.mxu0 %v1507
      %v1526 = vpop.f32.mrf.mxu0
      %v1527 = vadd.f32 %v910, %v1526
      %1528 = vdwg.mxu0
      %v1529 = vadd.f32 %v1481, %v1527
      %v1530 = vsel %vm353, %v1529, 0.0
      %1531 = vadd.xlane.f32.xlu0 %v1530
      %v1532 = vpop.xlane.xlu0 %1531
      %v1533 = vmul.f32 %v1532, %v861
      %v1534 = vsub.f32 %v1529, %v1533
      %v1535 = vmul.f32 %v1534, %v1534
      %v1536 = vsel %vm353, %v1535, 0.0
      %1537 = vadd.xlane.f32.xlu0 %v1536
      %v1538 = vpop.xlane.xlu0 %1537
      %v1539 = vmul.f32 %v1538, %v861
      %v1540 = vadd.f32 %v1539, 1e-05
      %v1541 = vrsqrt.pop %v1540
      %v1542 = vmul.f32 %v1541, %v1540
      %v1543 = vmul.f32 %v1542, %v1541
      %v1544 = vmul.f32 0.5, %v1543
      %v1545 = vsub.f32 1.5, %v1544
      %v1546 = vmul.f32 %v1541, %v1545
      %vm1547 = vweird.f32 %v1540
      %vm1548 = vweird.f32 %v1541
      %vm1549 = vmor %vm1547, %vm1548
      %v1550 = vsel %vm1549, %v1541, %v1546
      %v1551 = vmul.f32 %v1534, %v1550
      %v1552 = vmul.f32 %v1551, %v958
      %v1553 = vadd.f32 %v1552, %v960
      %v1555 = vsel %vm353, %v1553, 0
      %1557 = vmatpush.msra.mxu0 0.0
      %1558 = vmatpush.msra.mxu0 0.0
      %1559 = vmatpush.msra.mxu0 0.0
      %1560 = vmatpush.msra.mxu0 0.0
      %1561 = vmatpush.msra.mxu0 0.0
      %1562 = vmatpush.msra.mxu0 0.0
      %1563 = vmatpush.msra.mxu0 0.0
      %1564 = vmatpush.msra.mxu0 0.0
      %1565 = vmatpush.msra.mxu0 0.0
      %1566 = vmatpush.msra.mxu0 0.0
      %1567 = vmatpush.msra.mxu0 0.0
      %1568 = vmatpush.msra.mxu0 0.0
      %1569 = vmatpush.msra.mxu0 %v306
      %1570 = vmatpush.msra.mxu0 %v305
      %1571 = vmatpush.msra.mxu0 %v304
      %1572 = vmatpush.msra.mxu0 %v303
      %1573 = vmatmul.f32.gmra.mxu0 %v1555
      %v1574 = vpop.f32.mrf.mxu0
      %v1575 = vadd.f32 %v345, %v1574
      %1576 = vdwg.mxu0
      %1577 = vmatpush.msra.mxu0 0.0
      %1578 = vmatpush.msra.mxu0 0.0
      %1579 = vmatpush.msra.mxu0 0.0
      %1580 = vmatpush.msra.mxu0 0.0
      %1581 = vmatpush.msra.mxu0 0.0
      %1582 = vmatpush.msra.mxu0 0.0
      %1583 = vmatpush.msra.mxu0 0.0
      %1584 = vmatpush.msra.mxu0 0.0
      %1585 = vmatpush.msra.mxu0 0.0
      %1586 = vmatpush.msra.mxu0 0.0
      %1587 = vmatpush.msra.mxu0 0.0
      %1588 = vmatpush.msra.mxu0 0.0
      %1589 = vmatpush.msra.mxu0 %v310
      %1590 = vmatpush.msra.mxu0 %v309
      %1591 = vmatpush.msra.mxu0 %v308
      %1592 = vmatpush.msra.mxu0 %v307
      %1593 = vmatmul.f32.gmra.mxu0 %v1555
      %v1594 = vpop.f32.mrf.mxu0
      %v1595 = vadd.f32 %v346, %v1594
      %1596 = vdwg.mxu0
      %1597 = vmatpush.msra.mxu0 0.0
      %1598 = vmatpush.msra.mxu0 0.0
      %1599 = vmatpush.msra.mxu0 0.0
      %1600 = vmatpush.msra.mxu0 0.0
      %1601 = vmatpush.msra.mxu0 0.0
      %1602 = vmatpush.msra.mxu0 0.0
      %1603 = vmatpush.msra.mxu0 0.0
      %1604 = vmatpush.msra.mxu0 0.0
      %1605 = vmatpush.msra.mxu0 0.0
      %1606 = vmatpush.msra.mxu0 0.0
      %1607 = vmatpush.msra.mxu0 0.0
      %1608 = vmatpush.msra.mxu0 0.0
      %1609 = vmatpush.msra.mxu0 %v314
      %1610 = vmatpush.msra.mxu0 %v313
      %1611 = vmatpush.msra.mxu0 %v312
      %1612 = vmatpush.msra.mxu0 %v311
      %1613 = vmatmul.f32.gmra.mxu0 %v1555
      %v1614 = vpop.f32.mrf.mxu0
      %v1615 = vadd.f32 %v347, %v1614
      %1616 = vdwg.mxu0
      %1617 = vmatpush.msra.mxu0 0.0
      %1618 = vmatpush.msra.mxu0 0.0
      %1619 = vmatpush.msra.mxu0 0.0
      %1620 = vmatpush.msra.mxu0 0.0
      %1621 = vmatpush.msra.mxu0 0.0
      %1622 = vmatpush.msra.mxu0 0.0
      %1623 = vmatpush.msra.mxu0 0.0
      %1624 = vmatpush.msra.mxu0 0.0
      %1625 = vmatpush.msra.mxu0 0.0
      %1626 = vmatpush.msra.mxu0 0.0
      %1627 = vmatpush.msra.mxu0 0.0
      %1628 = vmatpush.msra.mxu0 0.0
      %1629 = vmatpush.msra.mxu0 %v318
      %1630 = vmatpush.msra.mxu0 %v317
      %1631 = vmatpush.msra.mxu0 %v316
      %1632 = vmatpush.msra.mxu0 %v315
      %1633 = vmatmul.f32.gmra.mxu0 %v1555
      %v1634 = vpop.f32.mrf.mxu0
      %v1635 = vadd.f32 %v348, %v1634
      %1636 = vdwg.mxu0
      %1638 = vrot.lane.b32.xlu0 %v1575, 120
      %v1639 = vpop.permute.xlu0 %1638
      %v1640 = vsel %vm440, %v1575, 0
      %v1642 = vsel %vm440, %v1639, 0
      %1644 = vmatpush.xpose.msra.mxu0 0.0
      %1645 = vmatpush.xpose.msra.mxu0 0.0
      %1646 = vmatpush.xpose.msra.mxu0 0.0
      %1647 = vmatpush.xpose.msra.mxu0 0.0
      %1648 = vmatpush.xpose.msra.mxu0 0.0
      %1649 = vmatpush.xpose.msra.mxu0 0.0
      %1650 = vmatpush.xpose.msra.mxu0 0.0
      %1651 = vmatpush.xpose.msra.mxu0 0.0
      %1652 = vmatpush.xpose.msra.mxu0 0.0
      %1653 = vmatpush.xpose.msra.mxu0 0.0
      %1654 = vmatpush.xpose.msra.mxu0 0.0
      %1655 = vmatpush.xpose.msra.mxu0 0.0
      %1656 = vmatpush.xpose.msra.mxu0 0.0
      %1657 = vmatpush.xpose.msra.mxu0 0.0
      %1658 = vmatpush.xpose.msra.mxu0 0.0
      %1659 = vmatpush.xpose.msra.mxu0 %v1642
      %1660 = vmatmul.f32.gmra.mxu0 %v1640
      %v1661 = vpop.f32.mrf.mxu0
      %v1662 = vadd.f32 %v302, %v1661
      %1663 = vdwg.mxu0
      %1665 = vrot.lane.b32.xlu0 %v1595, 120
      %v1666 = vpop.permute.xlu0 %1665
      %v1667 = vsel %vm440, %v1595, 0
      %v1669 = vsel %vm440, %v1666, 0
      %1671 = vmatpush.xpose.msra.mxu0 0.0
      %1672 = vmatpush.xpose.msra.mxu0 0.0
      %1673 = vmatpush.xpose.msra.mxu0 0.0
      %1674 = vmatpush.xpose.msra.mxu0 0.0
      %1675 = vmatpush.xpose.msra.mxu0 0.0
      %1676 = vmatpush.xpose.msra.mxu0 0.0
      %1677 = vmatpush.xpose.msra.mxu0 0.0
      %1678 = vmatpush.xpose.msra.mxu0 0.0
      %1679 = vmatpush.xpose.msra.mxu0 0.0
      %1680 = vmatpush.xpose.msra.mxu0 0.0
      %1681 = vmatpush.xpose.msra.mxu0 0.0
      %1682 = vmatpush.xpose.msra.mxu0 0.0
      %1683 = vmatpush.xpose.msra.mxu0 0.0
      %1684 = vmatpush.xpose.msra.mxu0 0.0
      %1685 = vmatpush.xpose.msra.mxu0 0.0
      %1686 = vmatpush.xpose.msra.mxu0 %v1669
      %1687 = vmatmul.f32.gmra.mxu0 %v1667
      %v1688 = vpop.f32.mrf.mxu0
      %v1689 = vadd.f32 %v302, %v1688
      %1690 = vdwg.mxu0
      %1692 = vrot.lane.b32.xlu0 %v1615, 120
      %v1693 = vpop.permute.xlu0 %1692
      %v1694 = vsel %vm440, %v1615, 0
      %v1696 = vsel %vm440, %v1693, 0
      %1698 = vmatpush.xpose.msra.mxu0 0.0
      %1699 = vmatpush.xpose.msra.mxu0 0.0
      %1700 = vmatpush.xpose.msra.mxu0 0.0
      %1701 = vmatpush.xpose.msra.mxu0 0.0
      %1702 = vmatpush.xpose.msra.mxu0 0.0
      %1703 = vmatpush.xpose.msra.mxu0 0.0
      %1704 = vmatpush.xpose.msra.mxu0 0.0
      %1705 = vmatpush.xpose.msra.mxu0 0.0
      %1706 = vmatpush.xpose.msra.mxu0 0.0
      %1707 = vmatpush.xpose.msra.mxu0 0.0
      %1708 = vmatpush.xpose.msra.mxu0 0.0
      %1709 = vmatpush.xpose.msra.mxu0 0.0
      %1710 = vmatpush.xpose.msra.mxu0 0.0
      %1711 = vmatpush.xpose.msra.mxu0 0.0
      %1712 = vmatpush.xpose.msra.mxu0 0.0
      %1713 = vmatpush.xpose.msra.mxu0 %v1696
      %1714 = vmatmul.f32.gmra.mxu0 %v1694
      %v1715 = vpop.f32.mrf.mxu0
      %v1716 = vadd.f32 %v302, %v1715
      %1717 = vdwg.mxu0
      %1719 = vrot.lane.b32.xlu0 %v1635, 120
      %v1720 = vpop.permute.xlu0 %1719
      %v1721 = vsel %vm440, %v1635, 0
      %v1723 = vsel %vm440, %v1720, 0
      %1725 = vmatpush.xpose.msra.mxu0 0.0
      %1726 = vmatpush.xpose.msra.mxu0 0.0
      %1727 = vmatpush.xpose.msra.mxu0 0.0
      %1728 = vmatpush.xpose.msra.mxu0 0.0
      %1729 = vmatpush.xpose.msra.mxu0 0.0
      %1730 = vmatpush.xpose.msra.mxu0 0.0
      %1731 = vmatpush.xpose.msra.mxu0 0.0
      %1732 = vmatpush.xpose.msra.mxu0 0.0
      %1733 = vmatpush.xpose.msra.mxu0 0.0
      %1734 = vmatpush.xpose.msra.mxu0 0.0
      %1735 = vmatpush.xpose.msra.mxu0 0.0
      %1736 = vmatpush.xpose.msra.mxu0 0.0
      %1737 = vmatpush.xpose.msra.mxu0 0.0
      %1738 = vmatpush.xpose.msra.mxu0 0.0
      %1739 = vmatpush.xpose.msra.mxu0 0.0
      %1740 = vmatpush.xpose.msra.mxu0 %v1723
      %1741 = vmatmul.f32.gmra.mxu0 %v1721
      %v1742 = vpop.f32.mrf.mxu0
      %v1743 = vadd.f32 %v302, %v1742
      %1744 = vdwg.mxu0
      %v1745 = vsel %vm440, %v1662, -inf
      %1746 = vmax.xlane.f32.xlu0 %v1745
      %v1747 = vpop.xlane.xlu0 %1746
      %v1748 = vsel %vm440, %v1689, -inf
      %1749 = vmax.xlane.f32.xlu0 %v1748
      %v1750 = vpop.xlane.xlu0 %1749
      %v1751 = vsel %vm440, %v1716, -inf
      %1752 = vmax.xlane.f32.xlu0 %v1751
      %v1753 = vpop.xlane.xlu0 %1752
      %v1754 = vsel %vm440, %v1743, -inf
      %1755 = vmax.xlane.f32.xlu0 %v1754
      %v1756 = vpop.xlane.xlu0 %1755
      %v1757 = vsub.f32 %v1662, %v1747
      %v1758 = vsub.f32 %v1689, %v1750
      %v1759 = vsub.f32 %v1716, %v1753
      %v1760 = vsub.f32 %v1743, %v1756
      %v1761 = vmul.f32 %v1757, 1.442695
      %v1762 = vpow.pop %v1761
      %v1763 = vmul.f32 %v1758, 1.442695
      %v1764 = vpow.pop %v1763
      %v1765 = vmul.f32 %v1759, 1.442695
      %v1766 = vpow.pop %v1765
      %v1767 = vmul.f32 %v1760, 1.442695
      %v1768 = vpow.pop %v1767
      %v1769 = vsel %vm440, %v1762, 0.0
      %1770 = vadd.xlane.f32.xlu0 %v1769
      %v1771 = vpop.xlane.xlu0 %1770
      %v1772 = vsel %vm440, %v1764, 0.0
      %1773 = vadd.xlane.f32.xlu0 %v1772
      %v1774 = vpop.xlane.xlu0 %1773
      %v1775 = vsel %vm440, %v1766, 0.0
      %1776 = vadd.xlane.f32.xlu0 %v1775
      %v1777 = vpop.xlane.xlu0 %1776
      %v1778 = vsel %vm440, %v1768, 0.0
      %1779 = vadd.xlane.f32.xlu0 %v1778
      %v1780 = vpop.xlane.xlu0 %1779
      %v1781 = vrcp.pop %v1771
      %v1782 = vmul.f32 %v1771, %v1781
      %v1783 = vsub.f32 1.0, %v1782
      %v1784 = vmul.f32 %v1781, %v1783
      %v1785 = vadd.f32 %v1781, %v1784
      %vm1786 = vweird.f32 %v1771
      %vm1787 = vweird.f32 %v1781
      %vm1788 = vmor %vm1786, %vm1787
      %v1789 = vsel %vm1788, %v1781, %v1785
      %v1790 = vand.u32 2147483647, %v1771
      %vm1791 = vcmp.eq.f32.partialorder %v1790, 8.507059e+37
      %v1792 = vand.u32 %v1771, 2147483648
      %v1793 = vor.u32 1.1754944e-38, %v1792
      %v1794 = vsel %vm1791, %v1793, %v1789
      %v1795 = vmul.f32 1.0, %v1794
      %v1796 = vrcp.pop %v1774
      %v1797 = vmul.f32 %v1774, %v1796
      %v1798 = vsub.f32 1.0, %v1797
      %v1799 = vmul.f32 %v1796, %v1798
      %v1800 = vadd.f32 %v1796, %v1799
      %vm1801 = vweird.f32 %v1774
      %vm1802 = vweird.f32 %v1796
      %vm1803 = vmor %vm1801, %vm1802
      %v1804 = vsel %vm1803, %v1796, %v1800
      %v1805 = vand.u32 2147483647, %v1774
      %vm1806 = vcmp.eq.f32.partialorder %v1805, 8.507059e+37
      %v1807 = vand.u32 %v1774, 2147483648
      %v1808 = vor.u32 1.1754944e-38, %v1807
      %v1809 = vsel %vm1806, %v1808, %v1804
      %v1810 = vmul.f32 1.0, %v1809
      %v1811 = vrcp.pop %v1777
      %v1812 = vmul.f32 %v1777, %v1811
      %v1813 = vsub.f32 1.0, %v1812
      %v1814 = vmul.f32 %v1811, %v1813
      %v1815 = vadd.f32 %v1811, %v1814
      %vm1816 = vweird.f32 %v1777
      %vm1817 = vweird.f32 %v1811
      %vm1818 = vmor %vm1816, %vm1817
      %v1819 = vsel %vm1818, %v1811, %v1815
      %v1820 = vand.u32 2147483647, %v1777
      %vm1821 = vcmp.eq.f32.partialorder %v1820, 8.507059e+37
      %v1822 = vand.u32 %v1777, 2147483648
      %v1823 = vor.u32 1.1754944e-38, %v1822
      %v1824 = vsel %vm1821, %v1823, %v1819
      %v1825 = vmul.f32 1.0, %v1824
      %v1826 = vrcp.pop %v1780
      %v1827 = vmul.f32 %v1780, %v1826
      %v1828 = vsub.f32 1.0, %v1827
      %v1829 = vmul.f32 %v1826, %v1828
      %v1830 = vadd.f32 %v1826, %v1829
      %vm1831 = vweird.f32 %v1780
      %vm1832 = vweird.f32 %v1826
      %vm1833 = vmor %vm1831, %vm1832
      %v1834 = vsel %vm1833, %v1826, %v1830
      %v1835 = vand.u32 2147483647, %v1780
      %vm1836 = vcmp.eq.f32.partialorder %v1835, 8.507059e+37
      %v1837 = vand.u32 %v1780, 2147483648
      %v1838 = vor.u32 1.1754944e-38, %v1837
      %v1839 = vsel %vm1836, %v1838, %v1834
      %v1840 = vmul.f32 1.0, %v1839
      %v1841 = vmul.f32 %v1762, %v1795
      %v1842 = vmul.f32 %v1764, %v1810
      %v1843 = vmul.f32 %v1766, %v1825
      %v1844 = vmul.f32 %v1768, %v1840
      %1845 = vrot.lane.b32.xlu0 %v1575, 112
      %v1846 = vpop.permute.xlu0 %1845
      %v1849 = vsel %vm440, %v1841, 0
      %1851 = vmatpush.msra.mxu0 0.0
      %1852 = vmatpush.msra.mxu0 0.0
      %1853 = vmatpush.msra.mxu0 0.0
      %1854 = vmatpush.msra.mxu0 0.0
      %1855 = vmatpush.msra.mxu0 0.0
      %1856 = vmatpush.msra.mxu0 0.0
      %1857 = vmatpush.msra.mxu0 0.0
      %1858 = vmatpush.msra.mxu0 0.0
      %1859 = vmatpush.msra.mxu0 0.0
      %1860 = vmatpush.msra.mxu0 0.0
      %1861 = vmatpush.msra.mxu0 0.0
      %1862 = vmatpush.msra.mxu0 0.0
      %1863 = vmatpush.msra.mxu0 0.0
      %1864 = vmatpush.msra.mxu0 0.0
      %1865 = vmatpush.msra.mxu0 0.0
      %1866 = vmatpush.msra.mxu0 %v1846
      %1867 = vmatmul.f32.gmra.mxu0 %v1849
      %v1868 = vpop.f32.mrf.mxu0
      %v1869 = vadd.f32 0.0, %v1868
      %1870 = vdwg.mxu0
      %1871 = vrot.lane.b32.xlu0 %v1595, 112
      %v1872 = vpop.permute.xlu0 %1871
      %v1875 = vsel %vm440, %v1842, 0
      %1877 = vmatpush.msra.mxu0 0.0
      %1878 = vmatpush.msra.mxu0 0.0
      %1879 = vmatpush.msra.mxu0 0.0
      %1880 = vmatpush.msra.mxu0 0.0
      %1881 = vmatpush.msra.mxu0 0.0
      %1882 = vmatpush.msra.mxu0 0.0
      %1883 = vmatpush.msra.mxu0 0.0
      %1884 = vmatpush.msra.mxu0 0.0
      %1885 = vmatpush.msra.mxu0 0.0
      %1886 = vmatpush.msra.mxu0 0.0
      %1887 = vmatpush.msra.mxu0 0.0
      %1888 = vmatpush.msra.mxu0 0.0
      %1889 = vmatpush.msra.mxu0 0.0
      %1890 = vmatpush.msra.mxu0 0.0
      %1891 = vmatpush.msra.mxu0 0.0
      %1892 = vmatpush.msra.mxu0 %v1872
      %1893 = vmatmul.f32.gmra.mxu0 %v1875
      %v1894 = vpop.f32.mrf.mxu0
      %v1895 = vadd.f32 0.0, %v1894
      %1896 = vdwg.mxu0
      %1897 = vrot.lane.b32.xlu0 %v1615, 112
      %v1898 = vpop.permute.xlu0 %1897
      %v1901 = vsel %vm440, %v1843, 0
      %1903 = vmatpush.msra.mxu0 0.0
      %1904 = vmatpush.msra.mxu0 0.0
      %1905 = vmatpush.msra.mxu0 0.0
      %1906 = vmatpush.msra.mxu0 0.0
      %1907 = vmatpush.msra.mxu0 0.0
      %1908 = vmatpush.msra.mxu0 0.0
      %1909 = vmatpush.msra.mxu0 0.0
      %1910 = vmatpush.msra.mxu0 0.0
      %1911 = vmatpush.msra.mxu0 0.0
      %1912 = vmatpush.msra.mxu0 0.0
      %1913 = vmatpush.msra.mxu0 0.0
      %1914 = vmatpush.msra.mxu0 0.0
      %1915 = vmatpush.msra.mxu0 0.0
      %1916 = vmatpush.msra.mxu0 0.0
      %1917 = vmatpush.msra.mxu0 0.0
      %1918 = vmatpush.msra.mxu0 %v1898
      %1919 = vmatmul.f32.gmra.mxu0 %v1901
      %v1920 = vpop.f32.mrf.mxu0
      %v1921 = vadd.f32 0.0, %v1920
      %1922 = vdwg.mxu0
      %1923 = vrot.lane.b32.xlu0 %v1635, 112
      %v1924 = vpop.permute.xlu0 %1923
      %v1927 = vsel %vm440, %v1844, 0
      %1929 = vmatpush.msra.mxu0 0.0
      %1930 = vmatpush.msra.mxu0 0.0
      %1931 = vmatpush.msra.mxu0 0.0
      %1932 = vmatpush.msra.mxu0 0.0
      %1933 = vmatpush.msra.mxu0 0.0
      %1934 = vmatpush.msra.mxu0 0.0
      %1935 = vmatpush.msra.mxu0 0.0
      %1936 = vmatpush.msra.mxu0 0.0
      %1937 = vmatpush.msra.mxu0 0.0
      %1938 = vmatpush.msra.mxu0 0.0
      %1939 = vmatpush.msra.mxu0 0.0
      %1940 = vmatpush.msra.mxu0 0.0
      %1941 = vmatpush.msra.mxu0 0.0
      %1942 = vmatpush.msra.mxu0 0.0
      %1943 = vmatpush.msra.mxu0 0.0
      %1944 = vmatpush.msra.mxu0 %v1924
      %1945 = vmatmul.f32.gmra.mxu0 %v1927
      %v1946 = vpop.f32.mrf.mxu0
      %v1947 = vadd.f32 0.0, %v1946
      %1948 = vdwg.mxu0
      %v1950 = vsel %vm440, %v1869, 0
      %1952 = vmatpush.msra.mxu0 0.0
      %1953 = vmatpush.msra.mxu0 0.0
      %1954 = vmatpush.msra.mxu0 0.0
      %1955 = vmatpush.msra.mxu0 0.0
      %1956 = vmatpush.msra.mxu0 0.0
      %1957 = vmatpush.msra.mxu0 0.0
      %1958 = vmatpush.msra.mxu0 0.0
      %1959 = vmatpush.msra.mxu0 0.0
      %1960 = vmatpush.msra.mxu0 0.0
      %1961 = vmatpush.msra.mxu0 0.0
      %1962 = vmatpush.msra.mxu0 0.0
      %1963 = vmatpush.msra.mxu0 0.0
      %1964 = vmatpush.msra.mxu0 0.0
      %1965 = vmatpush.msra.mxu0 0.0
      %1966 = vmatpush.msra.mxu0 0.0
      %1967 = vmatpush.msra.mxu0 %v323
      %1968 = vmatmul.f32.gmra.mxu0 %v1950
      %v1969 = vpop.f32.mrf.mxu0
      %v1970 = vadd.f32 0.0, %v1969
      %1971 = vdwg.mxu0
      %v1973 = vsel %vm440, %v1895, 0
      %1975 = vmatpush.msra.mxu0 0.0
      %1976 = vmatpush.msra.mxu0 0.0
      %1977 = vmatpush.msra.mxu0 0.0
      %1978 = vmatpush.msra.mxu0 0.0
      %1979 = vmatpush.msra.mxu0 0.0
      %1980 = vmatpush.msra.mxu0 0.0
      %1981 = vmatpush.msra.mxu0 0.0
      %1982 = vmatpush.msra.mxu0 0.0
      %1983 = vmatpush.msra.mxu0 0.0
      %1984 = vmatpush.msra.mxu0 0.0
      %1985 = vmatpush.msra.mxu0 0.0
      %1986 = vmatpush.msra.mxu0 0.0
      %1987 = vmatpush.msra.mxu0 0.0
      %1988 = vmatpush.msra.mxu0 0.0
      %1989 = vmatpush.msra.mxu0 0.0
      %1990 = vmatpush.msra.mxu0 %v324
      %1991 = vmatmul.f32.gmra.mxu0 %v1973
      %v1992 = vpop.f32.mrf.mxu0
      %v1993 = vadd.f32 0.0, %v1992
      %1994 = vdwg.mxu0
      %v1996 = vsel %vm440, %v1921, 0
      %1998 = vmatpush.msra.mxu0 0.0
      %1999 = vmatpush.msra.mxu0 0.0
      %2000 = vmatpush.msra.mxu0 0.0
      %2001 = vmatpush.msra.mxu0 0.0
      %2002 = vmatpush.msra.mxu0 0.0
      %2003 = vmatpush.msra.mxu0 0.0
      %2004 = vmatpush.msra.mxu0 0.0
      %2005 = vmatpush.msra.mxu0 0.0
      %2006 = vmatpush.msra.mxu0 0.0
      %2007 = vmatpush.msra.mxu0 0.0
      %2008 = vmatpush.msra.mxu0 0.0
      %2009 = vmatpush.msra.mxu0 0.0
      %2010 = vmatpush.msra.mxu0 0.0
      %2011 = vmatpush.msra.mxu0 0.0
      %2012 = vmatpush.msra.mxu0 0.0
      %2013 = vmatpush.msra.mxu0 %v325
      %2014 = vmatmul.f32.gmra.mxu0 %v1996
      %v2015 = vpop.f32.mrf.mxu0
      %v2016 = vadd.f32 0.0, %v2015
      %2017 = vdwg.mxu0
      %v2019 = vsel %vm440, %v1947, 0
      %2021 = vmatpush.msra.mxu0 0.0
      %2022 = vmatpush.msra.mxu0 0.0
      %2023 = vmatpush.msra.mxu0 0.0
      %2024 = vmatpush.msra.mxu0 0.0
      %2025 = vmatpush.msra.mxu0 0.0
      %2026 = vmatpush.msra.mxu0 0.0
      %2027 = vmatpush.msra.mxu0 0.0
      %2028 = vmatpush.msra.mxu0 0.0
      %2029 = vmatpush.msra.mxu0 0.0
      %2030 = vmatpush.msra.mxu0 0.0
      %2031 = vmatpush.msra.mxu0 0.0
      %2032 = vmatpush.msra.mxu0 0.0
      %2033 = vmatpush.msra.mxu0 0.0
      %2034 = vmatpush.msra.mxu0 0.0
      %2035 = vmatpush.msra.mxu0 0.0
      %2036 = vmatpush.msra.mxu0 %v326
      %2037 = vmatmul.f32.gmra.mxu0 %v2019
      %v2038 = vpop.f32.mrf.mxu0
      %v2039 = vadd.f32 0.0, %v2038
      %2040 = vdwg.mxu0
      %v2041 = vsel %vm353, %v1970, 0.0
      %v2042 = vsel %vm353, %v1993, 0.0
      %v2043 = vadd.f32 %v2041, %v2042
      %v2044 = vsel %vm353, %v2016, 0.0
      %v2045 = vadd.f32 %v2043, %v2044
      %v2046 = vsel %vm353, %v2039, 0.0
      %v2047 = vadd.f32 %v2045, %v2046
      %v2048 = vadd.f32 %v2047, %v849
      %v2049 = vadd.f32 %v1553, %v2048
      %v2050 = vsel %vm353, %v2049, 0.0
      %2051 = vadd.xlane.f32.xlu0 %v2050
      %v2052 = vpop.xlane.xlu0 %2051
      %v2053 = vmul.f32 %v2052, %v861
      %v2054 = vsub.f32 %v2049, %v2053
      %v2055 = vmul.f32 %v2054, %v2054
      %v2056 = vsel %vm353, %v2055, 0.0
      %2057 = vadd.xlane.f32.xlu0 %v2056
      %v2058 = vpop.xlane.xlu0 %2057
      %v2059 = vmul.f32 %v2058, %v861
      %v2060 = vadd.f32 %v2059, 1e-05
      %v2061 = vrsqrt.pop %v2060
      %v2062 = vmul.f32 %v2061, %v2060
      %v2063 = vmul.f32 %v2062, %v2061
      %v2064 = vmul.f32 0.5, %v2063
      %v2065 = vsub.f32 1.5, %v2064
      %v2066 = vmul.f32 %v2061, %v2065
      %vm2067 = vweird.f32 %v2060
      %vm2068 = vweird.f32 %v2061
      %vm2069 = vmor %vm2067, %vm2068
      %v2070 = vsel %vm2069, %v2061, %v2066
      %v2071 = vmul.f32 %v2054, %v2070
      %v2072 = vmul.f32 %v2071, %v881
      %v2073 = vadd.f32 %v2072, %v883
      %v2075 = vsel %vm353, %v2073, 0
      %2077 = vmatpush.msra.mxu0 0.0
      %2078 = vmatpush.msra.mxu0 0.0
      %2079 = vmatpush.msra.mxu0 0.0
      %2080 = vmatpush.msra.mxu0 0.0
      %2081 = vmatpush.msra.mxu0 0.0
      %2082 = vmatpush.msra.mxu0 0.0
      %2083 = vmatpush.msra.mxu0 0.0
      %2084 = vmatpush.msra.mxu0 0.0
      %2085 = vmatpush.msra.mxu0 0.0
      %2086 = vmatpush.msra.mxu0 0.0
      %2087 = vmatpush.msra.mxu0 0.0
      %2088 = vmatpush.msra.mxu0 0.0
      %2089 = vmatpush.msra.mxu0 %v330
      %2090 = vmatpush.msra.mxu0 %v329
      %2091 = vmatpush.msra.mxu0 %v328
      %2092 = vmatpush.msra.mxu0 %v327
      %2093 = vmatmul.f32.gmra.mxu0 %v2075
      %v2094 = vpop.f32.mrf.mxu0
      %v2095 = vadd.f32 %v885, %v2094
      %2096 = vdwg.mxu0
      %v2097 = vmax.f32 %v2095, 0.0
      %v2099 = vsel %vm911, %v2097, 0
      %2101 = vmatpush.msra.mxu0 0.0
      %2102 = vmatpush.msra.mxu0 0.0
      %2103 = vmatpush.msra.mxu0 0.0
      %2104 = vmatpush.msra.mxu0 0.0
      %2105 = vmatpush.msra.mxu0 0.0
      %2106 = vmatpush.msra.mxu0 0.0
      %2107 = vmatpush.msra.mxu0 0.0
      %2108 = vmatpush.msra.mxu0 0.0
      %2109 = vmatpush.msra.mxu0 %v338
      %2110 = vmatpush.msra.mxu0 %v337
      %2111 = vmatpush.msra.mxu0 %v336
      %2112 = vmatpush.msra.mxu0 %v335
      %2113 = vmatpush.msra.mxu0 %v334
      %2114 = vmatpush.msra.mxu0 %v333
      %2115 = vmatpush.msra.mxu0 %v332
      %2116 = vmatpush.msra.mxu0 %v331
      %2117 = vmatmul.f32.gmra.mxu0 %v2099
      %v2118 = vpop.f32.mrf.mxu0
      %v2119 = vadd.f32 %v910, %v2118
      %2120 = vdwg.mxu0
      %v2121 = vadd.f32 %v2073, %v2119
      %v2122 = vsel %vm353, %v2121, 0.0
      %2123 = vadd.xlane.f32.xlu0 %v2122
      %v2124 = vpop.xlane.xlu0 %2123
      %v2125 = vmul.f32 %v2124, %v861
      %v2126 = vsub.f32 %v2121, %v2125
      %v2127 = vmul.f32 %v2126, %v2126
      %v2128 = vsel %vm353, %v2127, 0.0
      %2129 = vadd.xlane.f32.xlu0 %v2128
      %v2130 = vpop.xlane.xlu0 %2129
      %v2131 = vmul.f32 %v2130, %v861
      %v2132 = vadd.f32 %v2131, 1e-05
      %v2133 = vrsqrt.pop %v2132
      %v2134 = vmul.f32 %v2133, %v2132
      %v2135 = vmul.f32 %v2134, %v2133
      %v2136 = vmul.f32 0.5, %v2135
      %v2137 = vsub.f32 1.5, %v2136
      %v2138 = vmul.f32 %v2133, %v2137
      %vm2139 = vweird.f32 %v2132
      %vm2140 = vweird.f32 %v2133
      %vm2141 = vmor %vm2139, %vm2140
      %v2142 = vsel %vm2141, %v2133, %v2138
      %v2143 = vmul.f32 %v2126, %v2142
      %v2144 = vmul.f32 %v2143, %v958
      %v2145 = vadd.f32 %v2144, %v960
      %v2146 = vsel %vm353, %v2145, 0.0
      %2147 = vadd.xlane.f32.xlu0 %v2146
      %v2148 = vpop.xlane.xlu0 %2147
      %v2149 = vmul.f32 %v2148, %v861
      %v2150 = vsub.f32 %v2145, %v2149
      %v2151 = vmul.f32 %v2150, %v2150
      %v2152 = vsel %vm353, %v2151, 0.0
      %2153 = vadd.xlane.f32.xlu0 %v2152
      %v2154 = vpop.xlane.xlu0 %2153
      %v2155 = vmul.f32 %v2154, %v861
      %v2156 = vadd.f32 %v2155, 1e-05
      %v2157 = vrsqrt.pop %v2156
      %v2158 = vmul.f32 %v2157, %v2156
      %v2159 = vmul.f32 %v2158, %v2157
      %v2160 = vmul.f32 0.5, %v2159
      %v2161 = vsub.f32 1.5, %v2160
      %v2162 = vmul.f32 %v2157, %v2161
      %vm2163 = vweird.f32 %v2156
      %vm2164 = vweird.f32 %v2157
      %vm2165 = vmor %vm2163, %vm2164
      %v2166 = vsel %vm2165, %v2157, %v2162
      %v2167 = vmul.f32 %v2150, %v2166
      %v2168 = vperm.slane %v339, 7
      %v2169 = vmul.f32 %v2167, %v2168
      %v2170 = vperm.slane %v340, 0
      %v2171 = vadd.f32 %v2169, %v2170
      %2172 = vst.msk [vmem:[%s300] sm:$0xff] %vm353, %v2171
      %p2173 = scmp.lt.s32.totalorder %s19, 1
      %s2174 = scalar_select %p2173, %s19, 1
      %s2175 = smul.addr %s2174, 8
      %s2176 = scalar_lea.vmem %s8, %s2175
      // Predicated region
      $region53: #{weight_sharing_encoder_forward.1} parent=51 // pred_check
        %p2177 = pneg %p210
      $region54: #{weight_sharing_encoder_forward.1} parent=51 // pred_check_branch
        %2179 = sbr.rel (%p2177) target = $region56
      $region55: #{weight_sharing_encoder_forward.1} parent=51 // pred_region
        _
      $region56: #{weight_sharing_encoder_forward.1} parent=51 // pred_fallthru
        _
    $region52: #{weight_sharing_encoder_forward.1} parent=5 // pred_fallthru
      _
    %p2180 = scmp.le.s32.totalorder 2, %s14
    // Predicated region
    $region57: #{weight_sharing_encoder_forward.1} parent=5 // pred_check
      %p2181 = pneg %p2180
    $region58: #{weight_sharing_encoder_forward.1} parent=5 // pred_check_branch
      %2183 = sbr.rel (%p2181) target = $region60
    $region59: #{weight_sharing_encoder_forward.1} parent=5 // pred_region
      %s2184 = ssub.s32 %s14, 2
      // Predicated region
      $region61: #{weight_sharing_encoder_forward.1} parent=59 // pred_check
        %p2185 = pneg %p216
      $region62: #{weight_sharing_encoder_forward.1} parent=59 // pred_check_branch
        %2187 = sbr.rel (%p2185) target = $region64
      $region63: #{weight_sharing_encoder_forward.1} parent=59 // pred_region
        %p2188 = scmp.lt.s32.totalorder %s20, 1
        %s2189 = scalar_select %p2188, %s20, 1
        %s2190 = smul.addr %s2189, 8
        %s2191 = scalar_lea.vmem %s8, %s2190
      $region64: #{weight_sharing_encoder_forward.1} parent=59 // pred_fallthru
        _
    $region60: #{weight_sharing_encoder_forward.1} parent=5 // pred_fallthru
      _
  $region6: #{weight_sharing_encoder_forward.1} parent=0 // loop_footer
    %s18 = sadd.s32 1, %s14
  $region7: #{weight_sharing_encoder_forward.1} parent=0 // loop_footer_branch
    %13 = sbr.rel target = $region3
  $region8: #{weight_sharing_encoder_forward.1} parent=0 // loop_exit
    _

</llo_original>
